<compile_context>
chip_gen: v5e
topology: v5e:2x2
jax: 0.10.0
libtpu: 0.0.40
codegen_flags: <defaults>
</compile_context>

<pallas_src>
import jax
import jax.numpy as jnp
from jax.experimental import pallas as pl
from jax.experimental.pallas import tpu as pltpu

_TM_TARGET = 4096  # sweep 4096-8192 on real shapes; memory/overhead-bound


def _choose_tm(M, batch):
    """Spatial tile size: multiple of 128 that divides M (no padding, no tail),
    as large as possible, but keeping >= 4 total grid steps when feasible
    (>= 2 per v7x TensorCore for double-buffered overlap)."""
    cands = [t for t in range(128, min(_TM_TARGET, M) + 1, 128) if M % t == 0]
    if not cands:
        return M  # full-extent block is always legal (no 128 divisibility needed)
    good = [t for t in cands if batch * (M // t) >= 4]
    return max(good) if good else max(cands)


def _gelu(x):
    # tanh-approximate GELU: transcendental goes to the EUP slot (free vs VALU).
    # (torch default is erf-GELU; max abs diff ~1e-3 * |x|, below bf16 precision.)
    c = 0.7978845608028654  # sqrt(2/pi)
    return 0.5 * x * (1.0 + jnp.tanh(c * (x + 0.044715 * x * x * x)))


# ----------------------------------------------------------------------------
# Generic spatial-tiled pallas_call wrapper (channels-first, lane-dense).
#   stream_inputs: (B, c, M) arrays streamed tile-by-tile over (batch, spatial)
#   const_inputs : small weights/biases, fully resident in VMEM every step
# ----------------------------------------------------------------------------
def _spatial_call(kernel, stream_inputs, const_inputs, cout, out_dtype):
    B, _, M = stream_inputs[0].shape
    tm = _choose_tm(M, B)
    n_blk = M // tm  # tm divides M by construction (or tm == M)

    in_specs = []
    for s in stream_inputs:
        c = s.shape[1]
        in_specs.append(pl.BlockSpec((1, c, tm), lambda b, i: (b, 0, i)))
    for cst in const_inputs:
        in_specs.append(
            pl.BlockSpec(cst.shape, lambda b, i, nd=cst.ndim: (0,) * nd))

    return pl.pallas_call(
        kernel,
        out_shape=jax.ShapeDtypeStruct((B, cout, M), out_dtype),
        grid_spec=pl.GridSpec(
            grid=(B, n_blk),
            in_specs=in_specs,
            out_specs=pl.BlockSpec((1, cout, tm), lambda b, i: (b, 0, i)),
        ),
        compiler_params=pltpu.CompilerParams(
            dimension_semantics=("parallel", "parallel")),
    )(*stream_inputs, *const_inputs)


# ----------------------------------------------------------------------------
# Fused kernels.  All tiles are (C, TM): channels on sublanes, spatial on lanes
# (lane-dense).  Matmuls are W @ X (bf16 in, f32 accumulate); epilogue in f32.
# ----------------------------------------------------------------------------
def _lift_encoder_kernel(x_ref, lw, lb, w1, b1, w2, b2, o_ref):
    # h0 = lifting(x); out = relu(conv2(relu(conv1(h0))) + h0)
    x = x_ref[0]                                                  # (cin, TM) bf16
    h0 = jnp.dot(lw[...], x, preferred_element_type=jnp.float32) + lb[...]
    h0b = h0.astype(x.dtype)
    h1 = jnp.maximum(
        jnp.dot(w1[...], h0b, preferred_element_type=jnp.float32) + b1[...], 0.0)
    h2 = jnp.dot(w2[...], h1.astype(x.dtype),
                 preferred_element_type=jnp.float32) + b2[...] + h0
    o_ref[0] = jnp.maximum(h2, 0.0).astype(o_ref.dtype)


def _fourier_skip_kernel(x_ref, fc_ref, sw, sb, o_ref):
    # FourierLayer3d: out = gelu(skip(x) + spectral(x)) + x
    x = x_ref[0]                                                  # (hid, TM) bf16
    s = jnp.dot(sw[...], x, preferred_element_type=jnp.float32) + sb[...]
    y = _gelu(s + fc_ref[0].astype(jnp.float32))
    o_ref[0] = (y + x.astype(jnp.float32)).astype(o_ref.dtype)


def _decoder_proj_kernel(x_ref, w1, b1, w2, b2, p1w, p1b, p2w, p2b, o_ref):
    # decoder resblock + projection (conv -> relu -> conv), fully fused
    x = x_ref[0]                                                  # (hid, TM) bf16
    xf = x.astype(jnp.float32)
    h1 = jnp.maximum(
        jnp.dot(w1[...], x, preferred_element_type=jnp.float32) + b1[...], 0.0)
    h2 = jnp.maximum(
        jnp.dot(w2[...], h1.astype(x.dtype),
                preferred_element_type=jnp.float32) + b2[...] + xf, 0.0)
    h3 = jnp.maximum(
        jnp.dot(p1w[...], h2.astype(x.dtype),
                preferred_element_type=jnp.float32) + p1b[...], 0.0)
    out = jnp.dot(p2w[...], h3.astype(x.dtype),
                  preferred_element_type=jnp.float32) + p2b[...]
    o_ref[0] = out.astype(o_ref.dtype)


# ----------------------------------------------------------------------------
# Spectral conv (dense, factorization=None), channels-first (NCDHW); FFT in JAX.
# Weights stored as (m1, m2, m3, cin, cout).  The full spectrum is assembled
# ONCE by concatenating the four low-mode corners with zero blocks (no repeated
# read-modify-write scatters over the big complex64 buffer).
# ----------------------------------------------------------------------------
def spectral_conv3d(x_ncdhw, weights, n_modes):
    B, cin, D, H, W = x_ncdhw.shape
    cout = weights[0].shape[-1]
    m1, m2, m3 = n_modes
    Wr = W // 2 + 1
    assert 2 * m1 <= D and 2 * m2 <= H and m3 <= Wr, (
        "n_modes too large for spatial dims", (m1, m2, m3), (D, H, W))

    x_ft = jnp.fft.rfftn(x_ncdhw.astype(jnp.float32), axes=(2, 3, 4))

    def corner(w_c, s1, s2):
        blk = x_ft[:, :, s1, s2, :m3]                    # (B, cin, m1, m2, m3)
        return jnp.einsum("bixyz,xyzio->boxyz", blk, w_c)

    c00 = corner(weights[0], slice(0, m1), slice(0, m2))
    c01 = corner(weights[1], slice(0, m1), slice(H - m2, H))
    c10 = corner(weights[2], slice(D - m1, D), slice(0, m2))
    c11 = corner(weights[3], slice(D - m1, D), slice(H - m2, H))

    zH = jnp.zeros((B, cout, m1, H - 2 * m2, m3), jnp.complex64)
    top = jnp.concatenate([c00, zH, c01], axis=3)        # (B, cout, m1, H, m3)
    bot = jnp.concatenate([c10, zH, c11], axis=3)
    zD = jnp.zeros((B, cout, D - 2 * m1, H, m3), jnp.complex64)
    full = jnp.concatenate([top, zD, bot], axis=2)       # (B, cout, D, H, m3)
    zW = jnp.zeros((B, cout, D, H, Wr - m3), jnp.complex64)
    out_ft = jnp.concatenate([full, zW], axis=4)         # (B, cout, D, H, Wr)

    return jnp.fft.irfftn(out_ft, s=(D, H, W), axes=(2, 3, 4))


# ----------------------------------------------------------------------------
# Forward pass
# ----------------------------------------------------------------------------
def fno_reg3d_forward(params, x, y, cfg):
    # x, y: NCDHW (PyTorch layout) — stays channels-first end to end.
    xc = jnp.concatenate([x, y], axis=1)                 # (B, Cin, D, H, W)
    B, Cin, D, H, W = xc.shape
    hid = cfg["hidden_channels"]
    M = D * H * W

    x3d = xc.reshape(B, Cin, M).astype(jnp.bfloat16)     # no transpose needed

    # lifting + encoder resblock: one fused kernel (3 matmuls)
    enc = params["encoder"]
    h = _spatial_call(
        _lift_encoder_kernel,
        stream_inputs=[x3d],
        const_inputs=[params["lift_w"], params["lift_b"],
                      enc["w1"], enc["b1"], enc["w2"], enc["b2"]],
        cout=hid, out_dtype=jnp.bfloat16)                # (B, hid, M)

    # FNO blocks: FFT path in JAX, skip-conv + add + GELU + residual fused
    for blk in params["fno_blocks"]:
        fc = spectral_conv3d(h.reshape(B, hid, D, H, W), blk["spec_w"],
                             cfg["n_modes"])
        fc3d = fc.reshape(B, hid, M).astype(jnp.bfloat16)  # cast fused w/ irfftn epilogue
        h = _spatial_call(
            _fourier_skip_kernel,
            stream_inputs=[h, fc3d],
            const_inputs=[blk["skip_w"], blk["skip_b"]],
            cout=hid, out_dtype=jnp.bfloat16)

    # decoder resblock + projection: one fused kernel (4 matmuls)
    dec = params["decoder"]
    out3d = _spatial_call(
        _decoder_proj_kernel,
        stream_inputs=[h],
        const_inputs=[dec["w1"], dec["b1"], dec["w2"], dec["b2"],
                      params["proj1_w"], params["proj1_b"],
                      params["proj2_w"], params["proj2_b"]],
        cout=cfg["out_channels"], out_dtype=jnp.float32)

    return out3d.reshape(B, cfg["out_channels"], D, H, W)  # already NCDHW


# ----------------------------------------------------------------------------
# Deterministic parameter init (synthetic, not a checkpoint load).
# 1x1x1 convs stored as (cout, cin) for the W @ X (channels-first) kernels.
# ----------------------------------------------------------------------------
def _conv1_params(key, cin, cout):
    kw, kb = jax.random.split(key)
    w = (jax.random.normal(kw, (cout, cin), jnp.float32)
         / jnp.sqrt(float(cin))).astype(jnp.bfloat16)
    b = (jax.random.normal(kb, (cout,), jnp.float32) * 0.01).reshape(cout, 1)
    return w, b


def _spectral_weights(key, cin, cout, n_modes):
    m1, m2, m3 = n_modes
    scale = 1.0 / (cin * cout)
    keys = jax.random.split(key, 8)
    ws = []
    for c in range(4):
        wr = scale * jax.random.normal(keys[2 * c], (m1, m2, m3, cin, cout), jnp.float32)
        wi = scale * jax.random.normal(keys[2 * c + 1], (m1, m2, m3, cin, cout), jnp.float32)
        ws.append((wr + 1j * wi).astype(jnp.complex64))
    return ws


def init_params(key, cfg):
    hid = cfg["hidden_channels"]
    keys = iter(jax.random.split(key, 32))
    params = {}
    params["lift_w"], params["lift_b"] = _conv1_params(next(keys), cfg["in_channels"], hid)

    def resblock():
        w1, b1 = _conv1_params(next(keys), hid, hid)
        w2, b2 = _conv1_params(next(keys), hid, hid)
        return {"w1": w1, "b1": b1, "w2": w2, "b2": b2}

    params["encoder"] = resblock()
    params["fno_blocks"] = []
    for _ in range(cfg["n_layers"]):
        sw, sb = _conv1_params(next(keys), hid, hid)
        params["fno_blocks"].append({
            "skip_w": sw, "skip_b": sb,
            "spec_w": _spectral_weights(next(keys), hid, hid, cfg["n_modes"]),
        })
    params["decoder"] = resblock()
    params["proj1_w"], params["proj1_b"] = _conv1_params(
        next(keys), hid, cfg["projection_channels"])
    params["proj2_w"], params["proj2_b"] = _conv1_params(
        next(keys), cfg["projection_channels"], cfg["out_channels"])
    return params


if __name__ == "__main__":
    cfg = dict(
        in_channels=4,            # channels after torch.cat([x, y], dim=1)
        hidden_channels=32,
        n_modes=(4, 4, 4),
        n_layers=2,
        rank=0.5,
        factorization=None,
        projection_channels=64,
        out_channels=3,
    )
    key = jax.random.PRNGKey(0)
    kp, kx, ky = jax.random.split(key, 3)
    params = init_params(kp, cfg)

    # x and y each carry half of cfg['in_channels'] before concatenation
    x = jax.random.normal(kx, (2, 2, 8, 8, 8), jnp.float32)
    y = jax.random.normal(ky, (2, 2, 8, 8, 8), jnp.float32)

    fwd = jax.jit(lambda p, a, b: fno_reg3d_forward(p, a, b, cfg))
    out = fwd(params, x, y)
    jax.block_until_ready(out)
    assert out.shape == (2, cfg["out_channels"], 8, 8, 8), out.shape
    assert bool(jnp.all(jnp.isfinite(out)))
    print("KERNEL_OK")
</pallas_src>

<mosaic_0001>
module attributes {stable_mosaic.version = 11 : i64} {
  func.func @_lift_encoder_kernel(%arg0: i32, %arg1: i32, %arg2: memref<1x4x256xbf16, #tpu.memory_space<vmem>>, %arg3: memref<32x4xbf16, #tpu.memory_space<vmem>>, %arg4: memref<32x1xf32, #tpu.memory_space<vmem>>, %arg5: memref<32x32xbf16, #tpu.memory_space<vmem>>, %arg6: memref<32x1xf32, #tpu.memory_space<vmem>>, %arg7: memref<32x32xbf16, #tpu.memory_space<vmem>>, %arg8: memref<32x1xf32, #tpu.memory_space<vmem>>, %arg9: memref<1x32x256xbf16, #tpu.memory_space<vmem>>) attributes {dimension_semantics = [#tpu.dimension_semantics<parallel>, #tpu.dimension_semantics<parallel>], iteration_bounds = array<i64: 2, 2>, scalar_prefetch = 0 : i64, scratch_operands = 0 : i64, tpu.core_type = #tpu.core_type<tc>, window_params = [{transform_indices = @transform_0, window_bounds = array<i64: 1, 4, 256>}, {pipeline_mode = #tpu.pipeline_mode<synchronous>, transform_indices = @transform_1, window_bounds = array<i64: 32, 4>}, {pipeline_mode = #tpu.pipeline_mode<synchronous>, transform_indices = @transform_2, window_bounds = array<i64: 32, 1>}, {pipeline_mode = #tpu.pipeline_mode<synchronous>, transform_indices = @transform_3, window_bounds = array<i64: 32, 32>}, {pipeline_mode = #tpu.pipeline_mode<synchronous>, transform_indices = @transform_4, window_bounds = array<i64: 32, 1>}, {pipeline_mode = #tpu.pipeline_mode<synchronous>, transform_indices = @transform_5, window_bounds = array<i64: 32, 32>}, {pipeline_mode = #tpu.pipeline_mode<synchronous>, transform_indices = @transform_6, window_bounds = array<i64: 32, 1>}, {transform_indices = @transform_7, window_bounds = array<i64: 1, 32, 256>}]} {
    %c0 = arith.constant 0 : index
    %c0_0 = arith.constant 0 : index
    %c0_1 = arith.constant 0 : index
    %0 = vector.load %arg2[%c0, %c0_0, %c0_1] : memref<1x4x256xbf16, #tpu.memory_space<vmem>>, vector<1x4x256xbf16>
    %1 = vector.shape_cast %0 : vector<1x4x256xbf16> to vector<4x256xbf16>
    %c0_2 = arith.constant 0 : index
    %c0_3 = arith.constant 0 : index
    %2 = vector.load %arg3[%c0_2, %c0_3] : memref<32x4xbf16, #tpu.memory_space<vmem>>, vector<32x4xbf16>
    %cst = arith.constant dense<0.000000e+00> : vector<32x256xf32>
    %3 = tpu.matmul %2, %1, %cst {dimension_numbers = #tpu.dot_dimension_numbers<[1], [0], [0], [1], [0, 0, 1, 1], [], []>} : vector<32x4xbf16>, vector<4x256xbf16>, vector<32x256xf32> -> vector<32x256xf32>
    %c0_4 = arith.constant 0 : index
    %c0_5 = arith.constant 0 : index
    %4 = vector.load %arg4[%c0_4, %c0_5] : memref<32x1xf32, #tpu.memory_space<vmem>>, vector<32x1xf32>
    %5 = vector.broadcast %4 : vector<32x1xf32> to vector<32x256xf32>
    %6 = arith.addf %3, %5 : vector<32x256xf32>
    %7 = arith.truncf %6 : vector<32x256xf32> to vector<32x256xbf16>
    %c0_6 = arith.constant 0 : index
    %c0_7 = arith.constant 0 : index
    %8 = vector.load %arg5[%c0_6, %c0_7] : memref<32x32xbf16, #tpu.memory_space<vmem>>, vector<32x32xbf16>
    %cst_8 = arith.constant dense<0.000000e+00> : vector<32x256xf32>
    %9 = tpu.matmul %8, %7, %cst_8 {dimension_numbers = #tpu.dot_dimension_numbers<[1], [0], [0], [1], [0, 0, 1, 1], [], []>} : vector<32x32xbf16>, vector<32x256xbf16>, vector<32x256xf32> -> vector<32x256xf32>
    %c0_9 = arith.constant 0 : index
    %c0_10 = arith.constant 0 : index
    %10 = vector.load %arg6[%c0_9, %c0_10] : memref<32x1xf32, #tpu.memory_space<vmem>>, vector<32x1xf32>
    %11 = vector.broadcast %10 : vector<32x1xf32> to vector<32x256xf32>
    %12 = arith.addf %9, %11 : vector<32x256xf32>
    %cst_11 = arith.constant 0.000000e+00 : f32
    %13 = vector.broadcast %cst_11 : f32 to vector<32x256xf32>
    %14 = arith.maximumf %12, %13 : vector<32x256xf32>
    %c0_12 = arith.constant 0 : index
    %c0_13 = arith.constant 0 : index
    %15 = vector.load %arg7[%c0_12, %c0_13] : memref<32x32xbf16, #tpu.memory_space<vmem>>, vector<32x32xbf16>
    %16 = arith.truncf %14 : vector<32x256xf32> to vector<32x256xbf16>
    %cst_14 = arith.constant dense<0.000000e+00> : vector<32x256xf32>
    %17 = tpu.matmul %15, %16, %cst_14 {dimension_numbers = #tpu.dot_dimension_numbers<[1], [0], [0], [1], [0, 0, 1, 1], [], []>} : vector<32x32xbf16>, vector<32x256xbf16>, vector<32x256xf32> -> vector<32x256xf32>
    %c0_15 = arith.constant 0 : index
    %c0_16 = arith.constant 0 : index
    %18 = vector.load %arg8[%c0_15, %c0_16] : memref<32x1xf32, #tpu.memory_space<vmem>>, vector<32x1xf32>
    %19 = vector.broadcast %18 : vector<32x1xf32> to vector<32x256xf32>
    %20 = arith.addf %17, %19 : vector<32x256xf32>
    %21 = arith.addf %20, %6 : vector<32x256xf32>
    %cst_17 = arith.constant 0.000000e+00 : f32
    %22 = vector.broadcast %cst_17 : f32 to vector<32x256xf32>
    %23 = arith.maximumf %21, %22 : vector<32x256xf32>
    %24 = arith.truncf %23 : vector<32x256xf32> to vector<32x256xbf16>
    %c0_18 = arith.constant 0 : index
    %c0_19 = arith.constant 0 : index
    %c0_20 = arith.constant 0 : index
    %25 = vector.load %arg9[%c0_18, %c0_19, %c0_20] : memref<1x32x256xbf16, #tpu.memory_space<vmem>>, vector<1x32x256xbf16>
    %26 = vector.shape_cast %25 : vector<1x32x256xbf16> to vector<32x256xbf16>
    %27 = vector.shape_cast %24 : vector<32x256xbf16> to vector<1x32x256xbf16>
    tpu.vector_store %arg9[%c0_18, %c0_19, %c0_20], %27 {strides = array<i32>} : memref<1x32x256xbf16, #tpu.memory_space<vmem>>, vector<1x32x256xbf16>,
    return
  }
  func.func @transform_0(%arg0: i32, %arg1: i32) -> (i32, i32, i32) {
    %c0_i32 = arith.constant 0 : i32
    %c0_i32_0 = arith.constant 0 : i32
    return %arg0, %c0_i32, %arg1 : i32, i32, i32
  }
  func.func @transform_1(%arg0: i32, %arg1: i32) -> (i32, i32) {
    %c0_i32 = arith.constant 0 : i32
    %c0_i32_0 = arith.constant 0 : i32
    %c0_i32_1 = arith.constant 0 : i32
    return %c0_i32, %c0_i32_0 : i32, i32
  }
  func.func @transform_2(%arg0: i32, %arg1: i32) -> (i32, i32) {
    %c0_i32 = arith.constant 0 : i32
    %c0_i32_0 = arith.constant 0 : i32
    %c0_i32_1 = arith.constant 0 : i32
    return %c0_i32, %c0_i32_0 : i32, i32
  }
  func.func @transform_3(%arg0: i32, %arg1: i32) -> (i32, i32) {
    %c0_i32 = arith.constant 0 : i32
    %c0_i32_0 = arith.constant 0 : i32
    %c0_i32_1 = arith.constant 0 : i32
    return %c0_i32, %c0_i32_0 : i32, i32
  }
  func.func @transform_4(%arg0: i32, %arg1: i32) -> (i32, i32) {
    %c0_i32 = arith.constant 0 : i32
    %c0_i32_0 = arith.constant 0 : i32
    %c0_i32_1 = arith.constant 0 : i32
    return %c0_i32, %c0_i32_0 : i32, i32
  }
  func.func @transform_5(%arg0: i32, %arg1: i32) -> (i32, i32) {
    %c0_i32 = arith.constant 0 : i32
    %c0_i32_0 = arith.constant 0 : i32
    %c0_i32_1 = arith.constant 0 : i32
    return %c0_i32, %c0_i32_0 : i32, i32
  }
  func.func @transform_6(%arg0: i32, %arg1: i32) -> (i32, i32) {
    %c0_i32 = arith.constant 0 : i32
    %c0_i32_0 = arith.constant 0 : i32
    %c0_i32_1 = arith.constant 0 : i32
    return %c0_i32, %c0_i32_0 : i32, i32
  }
  func.func @transform_7(%arg0: i32, %arg1: i32) -> (i32, i32, i32) {
    %c0_i32 = arith.constant 0 : i32
    %c0_i32_0 = arith.constant 0 : i32
    return %arg0, %c0_i32, %arg1 : i32, i32, i32
  }
}

module attributes {stable_mosaic.version = 11 : i64} {
  func.func @_fourier_skip_kernel(%arg0: i32, %arg1: i32, %arg2: memref<1x32x256xbf16, #tpu.memory_space<vmem>>, %arg3: memref<1x32x256xbf16, #tpu.memory_space<vmem>>, %arg4: memref<32x32xbf16, #tpu.memory_space<vmem>>, %arg5: memref<32x1xf32, #tpu.memory_space<vmem>>, %arg6: memref<1x32x256xbf16, #tpu.memory_space<vmem>>) attributes {dimension_semantics = [#tpu.dimension_semantics<parallel>, #tpu.dimension_semantics<parallel>], iteration_bounds = array<i64: 2, 2>, scalar_prefetch = 0 : i64, scratch_operands = 0 : i64, tpu.core_type = #tpu.core_type<tc>, window_params = [{transform_indices = @transform_0, window_bounds = array<i64: 1, 32, 256>}, {transform_indices = @transform_1, window_bounds = array<i64: 1, 32, 256>}, {pipeline_mode = #tpu.pipeline_mode<synchronous>, transform_indices = @transform_2, window_bounds = array<i64: 32, 32>}, {pipeline_mode = #tpu.pipeline_mode<synchronous>, transform_indices = @transform_3, window_bounds = array<i64: 32, 1>}, {transform_indices = @transform_4, window_bounds = array<i64: 1, 32, 256>}]} {
    %c0 = arith.constant 0 : index
    %c0_0 = arith.constant 0 : index
    %c0_1 = arith.constant 0 : index
    %0 = vector.load %arg2[%c0, %c0_0, %c0_1] : memref<1x32x256xbf16, #tpu.memory_space<vmem>>, vector<1x32x256xbf16>
    %1 = vector.shape_cast %0 : vector<1x32x256xbf16> to vector<32x256xbf16>
    %c0_2 = arith.constant 0 : index
    %c0_3 = arith.constant 0 : index
    %2 = vector.load %arg4[%c0_2, %c0_3] : memref<32x32xbf16, #tpu.memory_space<vmem>>, vector<32x32xbf16>
    %cst = arith.constant dense<0.000000e+00> : vector<32x256xf32>
    %3 = tpu.matmul %2, %1, %cst {dimension_numbers = #tpu.dot_dimension_numbers<[1], [0], [0], [1], [0, 0, 1, 1], [], []>} : vector<32x32xbf16>, vector<32x256xbf16>, vector<32x256xf32> -> vector<32x256xf32>
    %c0_4 = arith.constant 0 : index
    %c0_5 = arith.constant 0 : index
    %4 = vector.load %arg5[%c0_4, %c0_5] : memref<32x1xf32, #tpu.memory_space<vmem>>, vector<32x1xf32>
    %5 = vector.broadcast %4 : vector<32x1xf32> to vector<32x256xf32>
    %6 = arith.addf %3, %5 : vector<32x256xf32>
    %c0_6 = arith.constant 0 : index
    %c0_7 = arith.constant 0 : index
    %c0_8 = arith.constant 0 : index
    %7 = vector.load %arg3[%c0_6, %c0_7, %c0_8] : memref<1x32x256xbf16, #tpu.memory_space<vmem>>, vector<1x32x256xbf16>
    %8 = vector.shape_cast %7 : vector<1x32x256xbf16> to vector<32x256xbf16>
    %9 = arith.extf %8 : vector<32x256xbf16> to vector<32x256xf32>
    %10 = arith.addf %6, %9 : vector<32x256xf32>
    %cst_9 = arith.constant 5.000000e-01 : f32
    %11 = vector.broadcast %cst_9 : f32 to vector<32x256xf32>
    %12 = arith.mulf %11, %10 : vector<32x256xf32>
    %cst_10 = arith.constant 4.471500e-02 : f32
    %13 = vector.broadcast %cst_10 : f32 to vector<32x256xf32>
    %14 = arith.mulf %13, %10 : vector<32x256xf32>
    %15 = arith.mulf %14, %10 : vector<32x256xf32>
    %16 = arith.mulf %15, %10 : vector<32x256xf32>
    %17 = arith.addf %10, %16 : vector<32x256xf32>
    %cst_11 = arith.constant 0.797884583 : f32
    %18 = vector.broadcast %cst_11 : f32 to vector<32x256xf32>
    %19 = arith.mulf %18, %17 : vector<32x256xf32>
    %20 = math.tanh %19 : vector<32x256xf32>
    %cst_12 = arith.constant 1.000000e+00 : f32
    %21 = vector.broadcast %cst_12 : f32 to vector<32x256xf32>
    %22 = arith.addf %21, %20 : vector<32x256xf32>
    %23 = arith.mulf %12, %22 : vector<32x256xf32>
    %24 = arith.extf %1 : vector<32x256xbf16> to vector<32x256xf32>
    %25 = arith.addf %23, %24 : vector<32x256xf32>
    %26 = arith.truncf %25 : vector<32x256xf32> to vector<32x256xbf16>
    %c0_13 = arith.constant 0 : index
    %c0_14 = arith.constant 0 : index
    %c0_15 = arith.constant 0 : index
    %27 = vector.load %arg6[%c0_13, %c0_14, %c0_15] : memref<1x32x256xbf16, #tpu.memory_space<vmem>>, vector<1x32x256xbf16>
    %28 = vector.shape_cast %27 : vector<1x32x256xbf16> to vector<32x256xbf16>
    %29 = vector.shape_cast %26 : vector<32x256xbf16> to vector<1x32x256xbf16>
    tpu.vector_store %arg6[%c0_13, %c0_14, %c0_15], %29 {strides = array<i32>} : memref<1x32x256xbf16, #tpu.memory_space<vmem>>, vector<1x32x256xbf16>,
    return
  }
  func.func @transform_0(%arg0: i32, %arg1: i32) -> (i32, i32, i32) {
    %c0_i32 = arith.constant 0 : i32
    %c0_i32_0 = arith.constant 0 : i32
    return %arg0, %c0_i32, %arg1 : i32, i32, i32
  }
  func.func @transform_1(%arg0: i32, %arg1: i32) -> (i32, i32, i32) {
    %c0_i32 = arith.constant 0 : i32
    %c0_i32_0 = arith.constant 0 : i32
    return %arg0, %c0_i32, %arg1 : i32, i32, i32
  }
  func.func @transform_2(%arg0: i32, %arg1: i32) -> (i32, i32) {
    %c0_i32 = arith.constant 0 : i32
    %c0_i32_0 = arith.constant 0 : i32
    %c0_i32_1 = arith.constant 0 : i32
    return %c0_i32, %c0_i32_0 : i32, i32
  }
  func.func @transform_3(%arg0: i32, %arg1: i32) -> (i32, i32) {
    %c0_i32 = arith.constant 0 : i32
    %c0_i32_0 = arith.constant 0 : i32
    %c0_i32_1 = arith.constant 0 : i32
    return %c0_i32, %c0_i32_0 : i32, i32
  }
  func.func @transform_4(%arg0: i32, %arg1: i32) -> (i32, i32, i32) {
    %c0_i32 = arith.constant 0 : i32
    %c0_i32_0 = arith.constant 0 : i32
    return %arg0, %c0_i32, %arg1 : i32, i32, i32
  }
}

module attributes {stable_mosaic.version = 11 : i64} {
  func.func @_decoder_proj_kernel(%arg0: i32, %arg1: i32, %arg2: memref<1x32x256xbf16, #tpu.memory_space<vmem>>, %arg3: memref<32x32xbf16, #tpu.memory_space<vmem>>, %arg4: memref<32x1xf32, #tpu.memory_space<vmem>>, %arg5: memref<32x32xbf16, #tpu.memory_space<vmem>>, %arg6: memref<32x1xf32, #tpu.memory_space<vmem>>, %arg7: memref<64x32xbf16, #tpu.memory_space<vmem>>, %arg8: memref<64x1xf32, #tpu.memory_space<vmem>>, %arg9: memref<3x64xbf16, #tpu.memory_space<vmem>>, %arg10: memref<3x1xf32, #tpu.memory_space<vmem>>, %arg11: memref<1x3x256xf32, #tpu.memory_space<vmem>>) attributes {dimension_semantics = [#tpu.dimension_semantics<parallel>, #tpu.dimension_semantics<parallel>], iteration_bounds = array<i64: 2, 2>, scalar_prefetch = 0 : i64, scratch_operands = 0 : i64, tpu.core_type = #tpu.core_type<tc>, window_params = [{transform_indices = @transform_0, window_bounds = array<i64: 1, 32, 256>}, {pipeline_mode = #tpu.pipeline_mode<synchronous>, transform_indices = @transform_1, window_bounds = array<i64: 32, 32>}, {pipeline_mode = #tpu.pipeline_mode<synchronous>, transform_indices = @transform_2, window_bounds = array<i64: 32, 1>}, {pipeline_mode = #tpu.pipeline_mode<synchronous>, transform_indices = @transform_3, window_bounds = array<i64: 32, 32>}, {pipeline_mode = #tpu.pipeline_mode<synchronous>, transform_indices = @transform_4, window_bounds = array<i64: 32, 1>}, {pipeline_mode = #tpu.pipeline_mode<synchronous>, transform_indices = @transform_5, window_bounds = array<i64: 64, 32>}, {pipeline_mode = #tpu.pipeline_mode<synchronous>, transform_indices = @transform_6, window_bounds = array<i64: 64, 1>}, {pipeline_mode = #tpu.pipeline_mode<synchronous>, transform_indices = @transform_7, window_bounds = array<i64: 3, 64>}, {pipeline_mode = #tpu.pipeline_mode<synchronous>, transform_indices = @transform_8, window_bounds = array<i64: 3, 1>}, {transform_indices = @transform_9, window_bounds = array<i64: 1, 3, 256>}]} {
    %c0 = arith.constant 0 : index
    %c0_0 = arith.constant 0 : index
    %c0_1 = arith.constant 0 : index
    %0 = vector.load %arg2[%c0, %c0_0, %c0_1] : memref<1x32x256xbf16, #tpu.memory_space<vmem>>, vector<1x32x256xbf16>
    %1 = vector.shape_cast %0 : vector<1x32x256xbf16> to vector<32x256xbf16>
    %2 = arith.extf %1 : vector<32x256xbf16> to vector<32x256xf32>
    %c0_2 = arith.constant 0 : index
    %c0_3 = arith.constant 0 : index
    %3 = vector.load %arg3[%c0_2, %c0_3] : memref<32x32xbf16, #tpu.memory_space<vmem>>, vector<32x32xbf16>
    %cst = arith.constant dense<0.000000e+00> : vector<32x256xf32>
    %4 = tpu.matmul %3, %1, %cst {dimension_numbers = #tpu.dot_dimension_numbers<[1], [0], [0], [1], [0, 0, 1, 1], [], []>} : vector<32x32xbf16>, vector<32x256xbf16>, vector<32x256xf32> -> vector<32x256xf32>
    %c0_4 = arith.constant 0 : index
    %c0_5 = arith.constant 0 : index
    %5 = vector.load %arg4[%c0_4, %c0_5] : memref<32x1xf32, #tpu.memory_space<vmem>>, vector<32x1xf32>
    %6 = vector.broadcast %5 : vector<32x1xf32> to vector<32x256xf32>
    %7 = arith.addf %4, %6 : vector<32x256xf32>
    %cst_6 = arith.constant 0.000000e+00 : f32
    %8 = vector.broadcast %cst_6 : f32 to vector<32x256xf32>
    %9 = arith.maximumf %7, %8 : vector<32x256xf32>
    %c0_7 = arith.constant 0 : index
    %c0_8 = arith.constant 0 : index
    %10 = vector.load %arg5[%c0_7, %c0_8] : memref<32x32xbf16, #tpu.memory_space<vmem>>, vector<32x32xbf16>
    %11 = arith.truncf %9 : vector<32x256xf32> to vector<32x256xbf16>
    %cst_9 = arith.constant dense<0.000000e+00> : vector<32x256xf32>
    %12 = tpu.matmul %10, %11, %cst_9 {dimension_numbers = #tpu.dot_dimension_numbers<[1], [0], [0], [1], [0, 0, 1, 1], [], []>} : vector<32x32xbf16>, vector<32x256xbf16>, vector<32x256xf32> -> vector<32x256xf32>
    %c0_10 = arith.constant 0 : index
    %c0_11 = arith.constant 0 : index
    %13 = vector.load %arg6[%c0_10, %c0_11] : memref<32x1xf32, #tpu.memory_space<vmem>>, vector<32x1xf32>
    %14 = vector.broadcast %13 : vector<32x1xf32> to vector<32x256xf32>
    %15 = arith.addf %12, %14 : vector<32x256xf32>
    %16 = arith.addf %15, %2 : vector<32x256xf32>
    %cst_12 = arith.constant 0.000000e+00 : f32
    %17 = vector.broadcast %cst_12 : f32 to vector<32x256xf32>
    %18 = arith.maximumf %16, %17 : vector<32x256xf32>
    %c0_13 = arith.constant 0 : index
    %c0_14 = arith.constant 0 : index
    %19 = vector.load %arg7[%c0_13, %c0_14] : memref<64x32xbf16, #tpu.memory_space<vmem>>, vector<64x32xbf16>
    %20 = arith.truncf %18 : vector<32x256xf32> to vector<32x256xbf16>
    %cst_15 = arith.constant dense<0.000000e+00> : vector<64x256xf32>
    %21 = tpu.matmul %19, %20, %cst_15 {dimension_numbers = #tpu.dot_dimension_numbers<[1], [0], [0], [1], [0, 0, 1, 1], [], []>} : vector<64x32xbf16>, vector<32x256xbf16>, vector<64x256xf32> -> vector<64x256xf32>
    %c0_16 = arith.constant 0 : index
    %c0_17 = arith.constant 0 : index
    %22 = vector.load %arg8[%c0_16, %c0_17] : memref<64x1xf32, #tpu.memory_space<vmem>>, vector<64x1xf32>
    %23 = vector.broadcast %22 : vector<64x1xf32> to vector<64x256xf32>
    %24 = arith.addf %21, %23 : vector<64x256xf32>
    %cst_18 = arith.constant 0.000000e+00 : f32
    %25 = vector.broadcast %cst_18 : f32 to vector<64x256xf32>
    %26 = arith.maximumf %24, %25 : vector<64x256xf32>
    %c0_19 = arith.constant 0 : index
    %c0_20 = arith.constant 0 : index
    %27 = vector.load %arg9[%c0_19, %c0_20] : memref<3x64xbf16, #tpu.memory_space<vmem>>, vector<3x64xbf16>
    %28 = arith.truncf %26 : vector<64x256xf32> to vector<64x256xbf16>
    %cst_21 = arith.constant dense<0.000000e+00> : vector<3x256xf32>
    %29 = tpu.matmul %27, %28, %cst_21 {dimension_numbers = #tpu.dot_dimension_numbers<[1], [0], [0], [1], [0, 0, 1, 1], [], []>} : vector<3x64xbf16>, vector<64x256xbf16>, vector<3x256xf32> -> vector<3x256xf32>
    %c0_22 = arith.constant 0 : index
    %c0_23 = arith.constant 0 : index
    %30 = vector.load %arg10[%c0_22, %c0_23] : memref<3x1xf32, #tpu.memory_space<vmem>>, vector<3x1xf32>
    %31 = vector.broadcast %30 : vector<3x1xf32> to vector<3x256xf32>
    %32 = arith.addf %29, %31 : vector<3x256xf32>
    %c0_24 = arith.constant 0 : index
    %c0_25 = arith.constant 0 : index
    %c0_26 = arith.constant 0 : index
    %33 = vector.load %arg11[%c0_24, %c0_25, %c0_26] : memref<1x3x256xf32, #tpu.memory_space<vmem>>, vector<1x3x256xf32>
    %34 = vector.shape_cast %33 : vector<1x3x256xf32> to vector<3x256xf32>
    %35 = vector.shape_cast %32 : vector<3x256xf32> to vector<1x3x256xf32>
    tpu.vector_store %arg11[%c0_24, %c0_25, %c0_26], %35 {strides = array<i32>} : memref<1x3x256xf32, #tpu.memory_space<vmem>>, vector<1x3x256xf32>,
    return
  }
  func.func @transform_0(%arg0: i32, %arg1: i32) -> (i32, i32, i32) {
    %c0_i32 = arith.constant 0 : i32
    %c0_i32_0 = arith.constant 0 : i32
    return %arg0, %c0_i32, %arg1 : i32, i32, i32
  }
  func.func @transform_1(%arg0: i32, %arg1: i32) -> (i32, i32) {
    %c0_i32 = arith.constant 0 : i32
    %c0_i32_0 = arith.constant 0 : i32
    %c0_i32_1 = arith.constant 0 : i32
    return %c0_i32, %c0_i32_0 : i32, i32
  }
  func.func @transform_2(%arg0: i32, %arg1: i32) -> (i32, i32) {
    %c0_i32 = arith.constant 0 : i32
    %c0_i32_0 = arith.constant 0 : i32
    %c0_i32_1 = arith.constant 0 : i32
    return %c0_i32, %c0_i32_0 : i32, i32
  }
  func.func @transform_3(%arg0: i32, %arg1: i32) -> (i32, i32) {
    %c0_i32 = arith.constant 0 : i32
    %c0_i32_0 = arith.constant 0 : i32
    %c0_i32_1 = arith.constant 0 : i32
    return %c0_i32, %c0_i32_0 : i32, i32
  }
  func.func @transform_4(%arg0: i32, %arg1: i32) -> (i32, i32) {
    %c0_i32 = arith.constant 0 : i32
    %c0_i32_0 = arith.constant 0 : i32
    %c0_i32_1 = arith.constant 0 : i32
    return %c0_i32, %c0_i32_0 : i32, i32
  }
  func.func @transform_5(%arg0: i32, %arg1: i32) -> (i32, i32) {
    %c0_i32 = arith.constant 0 : i32
    %c0_i32_0 = arith.constant 0 : i32
    %c0_i32_1 = arith.constant 0 : i32
    return %c0_i32, %c0_i32_0 : i32, i32
  }
  func.func @transform_6(%arg0: i32, %arg1: i32) -> (i32, i32) {
    %c0_i32 = arith.constant 0 : i32
    %c0_i32_0 = arith.constant 0 : i32
    %c0_i32_1 = arith.constant 0 : i32
    return %c0_i32, %c0_i32_0 : i32, i32
  }
  func.func @transform_7(%arg0: i32, %arg1: i32) -> (i32, i32) {
    %c0_i32 = arith.constant 0 : i32
    %c0_i32_0 = arith.constant 0 : i32
    %c0_i32_1 = arith.constant 0 : i32
    return %c0_i32, %c0_i32_0 : i32, i32
  }
  func.func @transform_8(%arg0: i32, %arg1: i32) -> (i32, i32) {
    %c0_i32 = arith.constant 0 : i32
    %c0_i32_0 = arith.constant 0 : i32
    %c0_i32_1 = arith.constant 0 : i32
    return %c0_i32, %c0_i32_0 : i32, i32
  }
  func.func @transform_9(%arg0: i32, %arg1: i32) -> (i32, i32, i32) {
    %c0_i32 = arith.constant 0 : i32
    %c0_i32_0 = arith.constant 0 : i32
    return %arg0, %c0_i32, %arg1 : i32, i32, i32
  }
}

</mosaic_0001>

<llo_original>
// kernel: _lambda_.4
$region0: #{_lambda_.4}
  #allocation0 [shape = 'u32[]', space=smem, size = 0x4, offset = 0x4, fixed_abs, tag = 'smem constant byte address 0x4 - core index']
  #allocation1 [shape = 'u32[72,128]{1,0:T(1,128)}', space=vmem, size = 0x9000, scoped, tag = 'internal scratch']
  %s0 = inlined_call_operand.vmem [shape: bf16[2,4,512], index: 0, kind: input, shape index: {}]
  %s1 = inlined_call_operand.vmem [shape: bf16[32,4], index: 1, kind: input, shape index: {}]
  %s2 = inlined_call_operand.vmem [shape: f32[32,1], index: 2, kind: input, shape index: {}]
  %s3 = inlined_call_operand.hbm [shape: bf16[32,32], index: 3, kind: input, shape index: {}]
  %s4 = inlined_call_operand.vmem [shape: f32[32,1], index: 4, kind: input, shape index: {}]
  %s5 = inlined_call_operand.hbm [shape: bf16[32,32], index: 5, kind: input, shape index: {}]
  %s6 = inlined_call_operand.vmem [shape: f32[32,1], index: 6, kind: input, shape index: {}]
  %s7 = inlined_call_operand.vmem [shape: bf16[2,32,512], index: 7, kind: output, shape index: {}]
  %s8 = sld [smem:[#allocation0]]
  $region103: #{_lambda_.4} parent=0
    _
  %s10 = ssub.s32 1, %s8
  %s11 = scalar_select 0, %s10, %s8
  $region1: #{_lambda_.4} parent=0
    #allocation2 [shape = 'u8[8192]{0}', space=vmem, size = 0x2000, scoped, tag = 'input window, operand 3, single buffered']
    #allocation3 [shape = 's32[2]{0}', space=sflag, size = 0x8, scoped, tag = 'scoped memory for _lambda_.4']
    #allocation4 [shape = 'u8[8192]{0}', space=vmem, size = 0x2000, scoped, tag = 'input window, operand 5, single buffered']
    #allocation5 [shape = 's32[1]{0}', space=sflag, size = 0x4, scoped, tag = 'scoped memory for _lambda_.4']
    #allocation6 [shape = 'u8[32768]{0}', space=vmem, size = 0x8000, scoped, tag = 'output window, operand 0']
    %12 = vsyncpa [#allocation3], 0
    %13 = vsyncpa [#allocation5], 0
    loop: start=0, step=1, limit=6
    $region2: #{_lambda_.4} parent=1 // loop_pre_header
      _
    $region3: #{_lambda_.4} parent=1 // loop_header
      %s15 = sphi 0, %s19
      %p16 = scmp.ge.s32.totalorder %s15, 6
      %s22 = sphi 0, %s34
      %s23 = sphi 0, %s30
      %s24 = sphi 0, %s22
      %s25 = sphi 0, %s23
      %s26 = sphi 0, %s24
      %s27 = sphi 0, %s25
      %s39 = sphi 0, %s41
      %s42 = sphi 0, %s39
      %s43 = sphi 0, %s42
      %s59 = sphi 0, %s43
      %s63 = sphi 0, %s63
      %s65 = sphi 0, %s63
      %s66 = sphi 0, %s65
      %s80 = sphi 0, %s66
      %s84 = sphi 0, %s84
      %s86 = sphi 0, %s84
      %s87 = sphi 0, %s86
      %s101 = sphi 0, %s87
      %s105 = sphi 0, %s105
      %s107 = sphi 0, %s105
      %s108 = sphi 0, %s107
      %s122 = sphi 0, %s108
      %s126 = sphi 0, %s126
      %s128 = sphi 0, %s126
      %s129 = sphi 0, %s128
      %s143 = sphi 0, %s129
      %s147 = sphi 0, %s147
      %s149 = sphi 0, %s147
      %s150 = sphi 0, %s149
      %s164 = sphi 0, %s150
      %s168 = sphi 0, %s168
      %s170 = sphi 0, %s168
      %s171 = sphi 0, %s170
      %s185 = sphi 0, %s171
      %s193 = sphi 0, %s195
      %s196 = sphi 0, %s193
      %s197 = sphi 0, %s196
      %s213 = sphi 0, %s197
    $region4: #{_lambda_.4} parent=1 // loop_header_branch
      %18 = sbr.rel (%p16) target = $region8
    $region5: #{_lambda_.4} parent=1 // loop_body
      %s20 = ssub.s32 %s15, 1
      %s21 = ssub.s32 %s15, 2
      %s28 = sadd.s32 1, %s23
      %p29 = scmp.ge.s32.totalorder %s28, 2
      %s30 = scalar_select %p29, 0, %s28
      %s31 = sadd.s32 1, %s22
      %s32 = scalar_select %p29, %s31, %s22
      %p33 = scmp.ge.s32.totalorder %s32, 2
      %s34 = scalar_select %p33, 0, %s32
      %s35 = ssub.s32 %s22, %s34
      %s36 = ssub.s32 %s23, %s30
      %s37 = sor.u32 %s35, %s36
      %p38 = scmp.eq.s32.totalorder %s37, 0
      %s40 = sadd.s32 %s39, 1
      %s41 = scalar_select %p38, %s39, %s40
      %p44 = pneg %p38
      %p45 = scmp.eq.s32.totalorder %s15, 3
      %p46 = por %p44, %p45
      %p47 = scmp.ne.s32.totalorder %s39, %s42
      %p48 = scmp.eq.s32.totalorder %s15, 0
      %p49 = por %p47, %p48
      %p50 = scmp.ne.s32.totalorder %s39, %s42
      %p51 = scmp.eq.s32.totalorder %s20, 3
      %p52 = por %p50, %p51
      %p53 = scmp.ne.s32.totalorder %s42, %s43
      %p54 = scmp.eq.s32.totalorder %s20, 0
      %p55 = por %p53, %p54
      %p56 = scmp.ne.s32.totalorder %s42, %s43
      %p57 = scmp.eq.s32.totalorder %s21, 3
      %p58 = por %p56, %p57
      %p60 = scmp.ne.s32.totalorder %s43, %s59
      %p61 = scmp.eq.s32.totalorder %s21, 0
      %p62 = por %p60, %p61
      %s64 = sadd.s32 %s63, 1
      %p67 = scmp.eq.s32.totalorder %s15, 3
      %p68 = scmp.ne.s32.totalorder %s63, %s65
      %p69 = scmp.eq.s32.totalorder %s15, 0
      %p70 = por %p68, %p69
      %p71 = scmp.ne.s32.totalorder %s63, %s65
      %p72 = scmp.eq.s32.totalorder %s20, 3
      %p73 = por %p71, %p72
      %p74 = scmp.ne.s32.totalorder %s65, %s66
      %p75 = scmp.eq.s32.totalorder %s20, 0
      %p76 = por %p74, %p75
      %p77 = scmp.ne.s32.totalorder %s65, %s66
      %p78 = scmp.eq.s32.totalorder %s21, 3
      %p79 = por %p77, %p78
      %p81 = scmp.ne.s32.totalorder %s66, %s80
      %p82 = scmp.eq.s32.totalorder %s21, 0
      %p83 = por %p81, %p82
      %s85 = sadd.s32 %s84, 1
      %p88 = scmp.eq.s32.totalorder %s15, 3
      %p89 = scmp.ne.s32.totalorder %s84, %s86
      %p90 = scmp.eq.s32.totalorder %s15, 0
      %p91 = por %p89, %p90
      %p92 = scmp.ne.s32.totalorder %s84, %s86
      %p93 = scmp.eq.s32.totalorder %s20, 3
      %p94 = por %p92, %p93
      %p95 = scmp.ne.s32.totalorder %s86, %s87
      %p96 = scmp.eq.s32.totalorder %s20, 0
      %p97 = por %p95, %p96
      %p98 = scmp.ne.s32.totalorder %s86, %s87
      %p99 = scmp.eq.s32.totalorder %s21, 3
      %p100 = por %p98, %p99
      %p102 = scmp.ne.s32.totalorder %s87, %s101
      %p103 = scmp.eq.s32.totalorder %s21, 0
      %p104 = por %p102, %p103
      %s106 = sadd.s32 %s105, 1
      %p109 = scmp.eq.s32.totalorder %s15, 3
      %p110 = scmp.ne.s32.totalorder %s105, %s107
      %p111 = scmp.eq.s32.totalorder %s15, 0
      %p112 = por %p110, %p111
      %p113 = scmp.ne.s32.totalorder %s105, %s107
      %p114 = scmp.eq.s32.totalorder %s20, 3
      %p115 = por %p113, %p114
      %p116 = scmp.ne.s32.totalorder %s107, %s108
      %p117 = scmp.eq.s32.totalorder %s20, 0
      %p118 = por %p116, %p117
      %p119 = scmp.ne.s32.totalorder %s107, %s108
      %p120 = scmp.eq.s32.totalorder %s21, 3
      %p121 = por %p119, %p120
      %p123 = scmp.ne.s32.totalorder %s108, %s122
      %p124 = scmp.eq.s32.totalorder %s21, 0
      %p125 = por %p123, %p124
      %s127 = sadd.s32 %s126, 1
      %p130 = scmp.eq.s32.totalorder %s15, 3
      %p131 = scmp.ne.s32.totalorder %s126, %s128
      %p132 = scmp.eq.s32.totalorder %s15, 0
      %p133 = por %p131, %p132
      %p134 = scmp.ne.s32.totalorder %s126, %s128
      %p135 = scmp.eq.s32.totalorder %s20, 3
      %p136 = por %p134, %p135
      %p137 = scmp.ne.s32.totalorder %s128, %s129
      %p138 = scmp.eq.s32.totalorder %s20, 0
      %p139 = por %p137, %p138
      %p140 = scmp.ne.s32.totalorder %s128, %s129
      %p141 = scmp.eq.s32.totalorder %s21, 3
      %p142 = por %p140, %p141
      %p144 = scmp.ne.s32.totalorder %s129, %s143
      %p145 = scmp.eq.s32.totalorder %s21, 0
      %p146 = por %p144, %p145
      %s148 = sadd.s32 %s147, 1
      %p151 = scmp.eq.s32.totalorder %s15, 3
      %p152 = scmp.ne.s32.totalorder %s147, %s149
      %p153 = scmp.eq.s32.totalorder %s15, 0
      %p154 = por %p152, %p153
      %p155 = scmp.ne.s32.totalorder %s147, %s149
      %p156 = scmp.eq.s32.totalorder %s20, 3
      %p157 = por %p155, %p156
      %p158 = scmp.ne.s32.totalorder %s149, %s150
      %p159 = scmp.eq.s32.totalorder %s20, 0
      %p160 = por %p158, %p159
      %p161 = scmp.ne.s32.totalorder %s149, %s150
      %p162 = scmp.eq.s32.totalorder %s21, 3
      %p163 = por %p161, %p162
      %p165 = scmp.ne.s32.totalorder %s150, %s164
      %p166 = scmp.eq.s32.totalorder %s21, 0
      %p167 = por %p165, %p166
      %s169 = sadd.s32 %s168, 1
      %p172 = scmp.eq.s32.totalorder %s15, 3
      %p173 = scmp.ne.s32.totalorder %s168, %s170
      %p174 = scmp.eq.s32.totalorder %s15, 0
      %p175 = por %p173, %p174
      %p176 = scmp.ne.s32.totalorder %s168, %s170
      %p177 = scmp.eq.s32.totalorder %s20, 3
      %p178 = por %p176, %p177
      %p179 = scmp.ne.s32.totalorder %s170, %s171
      %p180 = scmp.eq.s32.totalorder %s20, 0
      %p181 = por %p179, %p180
      %p182 = scmp.ne.s32.totalorder %s170, %s171
      %p183 = scmp.eq.s32.totalorder %s21, 3
      %p184 = por %p182, %p183
      %p186 = scmp.ne.s32.totalorder %s171, %s185
      %p187 = scmp.eq.s32.totalorder %s21, 0
      %p188 = por %p186, %p187
      %s189 = ssub.s32 %s22, %s34
      %s190 = ssub.s32 %s23, %s30
      %s191 = sor.u32 %s189, %s190
      %p192 = scmp.eq.s32.totalorder %s191, 0
      %s194 = sadd.s32 %s193, 1
      %s195 = scalar_select %p192, %s193, %s194
      %p198 = pneg %p192
      %p199 = scmp.eq.s32.totalorder %s15, 3
      %p200 = por %p198, %p199
      %p201 = scmp.ne.s32.totalorder %s193, %s196
      %p202 = scmp.eq.s32.totalorder %s15, 0
      %p203 = por %p201, %p202
      %p204 = scmp.ne.s32.totalorder %s193, %s196
      %p205 = scmp.eq.s32.totalorder %s20, 3
      %p206 = por %p204, %p205
      %p207 = scmp.ne.s32.totalorder %s196, %s197
      %p208 = scmp.eq.s32.totalorder %s20, 0
      %p209 = por %p207, %p208
      %p210 = scmp.ne.s32.totalorder %s196, %s197
      %p211 = scmp.eq.s32.totalorder %s21, 3
      %p212 = por %p210, %p211
      %p214 = scmp.ne.s32.totalorder %s197, %s213
      %p215 = scmp.eq.s32.totalorder %s21, 0
      %p216 = por %p214, %p215
      %p217 = scmp.le.s32.totalorder 1, %s15
      %p218 = scmp.lt.s32.totalorder %s15, 5
      %p219 = pnand %p217, %p218
      %p220 = pneg %p219
      // Predicated region
      $region9: #{_lambda_.4} parent=5 // pred_check
        _
      $region10: #{_lambda_.4} parent=5 // pred_check_branch
        %222 = sbr.rel (%p219) target = $region12
      $region11: #{_lambda_.4} parent=5 // pred_region
        %s223 = ssub.s32 %s15, 1
        // Predicated region
        $region13: #{_lambda_.4} parent=11 // pred_check
          %p224 = pneg %p76
        $region14: #{_lambda_.4} parent=11 // pred_check_branch
          %226 = sbr.rel (%p224) target = $region16
        $region15: #{_lambda_.4} parent=11 // pred_region
          _
        $region16: #{_lambda_.4} parent=11 // pred_fallthru
          _
        // Predicated region
        $region17: #{_lambda_.4} parent=11 // pred_check
          %p227 = pneg %p97
        $region18: #{_lambda_.4} parent=11 // pred_check_branch
          %229 = sbr.rel (%p227) target = $region20
        $region19: #{_lambda_.4} parent=11 // pred_region
          _
        $region20: #{_lambda_.4} parent=11 // pred_fallthru
          _
        // Predicated region
        $region21: #{_lambda_.4} parent=11 // pred_check
          %p230 = pneg %p118
        $region22: #{_lambda_.4} parent=11 // pred_check_branch
          %232 = sbr.rel (%p230) target = $region24
        $region23: #{_lambda_.4} parent=11 // pred_region
          %234 = vsyncadd [#allocation3], 0
          %s235 = sshll.u32 %s3, 4
          %s236 = int_to_ptr.hbm [resolvable:$true] %s235
          %s237 = sshll.u32 [#allocation2], 4
          %s238 = int_to_ptr.vmem [resolvable:$true] %s237
          %243 = dma.hbm_to_vmem [thread:$0]  %s236, 256, %s238, [#allocation3], 64, 64, 4
        $region24: #{_lambda_.4} parent=11 // pred_fallthru
          _
        // Predicated region
        $region25: #{_lambda_.4} parent=11 // pred_check
          %p244 = pneg %p139
        $region26: #{_lambda_.4} parent=11 // pred_check_branch
          %246 = sbr.rel (%p244) target = $region28
        $region27: #{_lambda_.4} parent=11 // pred_region
          _
        $region28: #{_lambda_.4} parent=11 // pred_fallthru
          _
        // Predicated region
        $region29: #{_lambda_.4} parent=11 // pred_check
          %p247 = pneg %p160
        $region30: #{_lambda_.4} parent=11 // pred_check_branch
          %249 = sbr.rel (%p247) target = $region32
        $region31: #{_lambda_.4} parent=11 // pred_region
          %251 = vsyncadd [#allocation5], 0
          %s252 = sshll.u32 %s5, 4
          %s253 = int_to_ptr.hbm [resolvable:$true] %s252
          %s254 = sshll.u32 [#allocation4], 4
          %s255 = int_to_ptr.vmem [resolvable:$true] %s254
          %260 = dma.hbm_to_vmem [thread:$0]  %s253, 256, %s255, [#allocation5], 64, 64, 4
        $region32: #{_lambda_.4} parent=11 // pred_fallthru
          _
        // Predicated region
        $region33: #{_lambda_.4} parent=11 // pred_check
          %p261 = pneg %p181
        $region34: #{_lambda_.4} parent=11 // pred_check_branch
          %263 = sbr.rel (%p261) target = $region36
        $region35: #{_lambda_.4} parent=11 // pred_region
          _
        $region36: #{_lambda_.4} parent=11 // pred_fallthru
          _
      $region12: #{_lambda_.4} parent=5 // pred_fallthru
        _
      %p264 = scmp.lt.s32.totalorder %s15, 4
      // Predicated region
      $region37: #{_lambda_.4} parent=5 // pred_check
        %p265 = pneg %p264
      $region38: #{_lambda_.4} parent=5 // pred_check_branch
        %267 = sbr.rel (%p265) target = $region40
      $region39: #{_lambda_.4} parent=5 // pred_region
        // Predicated region
        $region41: #{_lambda_.4} parent=39 // pred_check
          %p268 = pneg %p49
        $region42: #{_lambda_.4} parent=39 // pred_check_branch
          %270 = sbr.rel (%p268) target = $region44
        $region43: #{_lambda_.4} parent=39 // pred_region
          %s271 = smul.u32 2, %s23
          %p272 = scmp.lt.s32.totalorder %s22, 1
          %s273 = scalar_select %p272, %s22, 1
          %p274 = scmp.lt.s32.totalorder %s271, 3
          %s275 = scalar_select %p274, %s271, 3
          %s276 = smul.addr %s273, 4
          %s277 = sadd.s32 %s275, %s276
          %s278 = smul.addr %s277, 2
          %s279 = scalar_lea.vmem %s0, %s278
          %s280 = smul.u32 2, %s23
        $region44: #{_lambda_.4} parent=39 // pred_fallthru
          _
      $region40: #{_lambda_.4} parent=5 // pred_fallthru
        _
      %p281 = scmp.le.s32.totalorder 1, %s15
      %p282 = scmp.lt.s32.totalorder %s15, 5
      %p283 = pnand %p281, %p282
      %p284 = pneg %p283
      // Predicated region
      $region45: #{_lambda_.4} parent=5 // pred_check
        _
      $region46: #{_lambda_.4} parent=5 // pred_check_branch
        %286 = sbr.rel (%p283) target = $region48
      $region47: #{_lambda_.4} parent=5 // pred_region
        %s287 = ssub.s32 %s15, 1
        // Predicated region
        $region49: #{_lambda_.4} parent=47 // pred_check
          %p288 = pneg %p118
        $region50: #{_lambda_.4} parent=47 // pred_check_branch
          %290 = sbr.rel (%p288) target = $region52
        $region51: #{_lambda_.4} parent=47 // pred_region
          %292 = dma.done [#allocation3], 256
        $region52: #{_lambda_.4} parent=47 // pred_fallthru
          _
        // Predicated region
        $region53: #{_lambda_.4} parent=47 // pred_check
          %p293 = pneg %p160
        $region54: #{_lambda_.4} parent=47 // pred_check_branch
          %295 = sbr.rel (%p293) target = $region56
        $region55: #{_lambda_.4} parent=47 // pred_region
          %297 = dma.done [#allocation5], 256
        $region56: #{_lambda_.4} parent=47 // pred_fallthru
          _
        %s298 = smul.u32 2, %s25
        %p299 = scmp.lt.s32.totalorder %s24, 1
        %s300 = scalar_select %p299, %s24, 1
        %p301 = scmp.lt.s32.totalorder %s298, 3
        %s302 = scalar_select %p301, %s298, 3
        %s303 = smul.addr %s300, 4
        %s304 = sadd.s32 %s302, %s303
        %s305 = smul.addr %s304, 2
        %s306 = scalar_lea.vmem %s0, %s305
        %p307 = pneg %p55
        %p308 = pneg %p52
        %p309 = pneg %p76
        %p310 = pneg %p73
        %p311 = pneg %p97
        %p312 = pneg %p94
        %p313 = pneg %p118
        %p314 = pneg %p115
        %p315 = pneg %p139
        %p316 = pneg %p136
        %p317 = pneg %p160
        %p318 = pneg %p157
        %p319 = pneg %p181
        %p320 = pneg %p178
        %p321 = pneg %p209
        %p322 = pneg %p206
        %s323 = sand.u32 %s196, 1
        %s324 = sand.u32 %s196, 1
        %s325 = smul.addr %s324, 32
        %s326 = scalar_lea.vmem [#allocation6], %s325
        %s327 = smul.u32 2, %s25
        %p328 = scmp.lt.s32.totalorder %s24, 1
        %s329 = scalar_select %p328, %s24, 1
        %p330 = scmp.lt.s32.totalorder %s327, 3
        %s331 = scalar_select %p330, %s327, 3
        %s332 = smul.addr %s329, 4
        %s333 = sadd.s32 %s331, %s332
        %s334 = smul.addr %s333, 2
        %s335 = scalar_lea.vmem %s0, %s334
        %s336 = smul.u32 2, %s25
        %s337 = smul.u32 2, %s25
        %v339 = vld [vmem:[%s335] sm:$0xf]
        %v340 = vld [vmem:[%s1] sm:$0xf]
        %v341 = vld [vmem:[%s1 + $0x4] sm:$0xf]
        %v342 = vld [vmem:[%s1 + $0x8] sm:$0xf]
        %v343 = vld [vmem:[%s1 + $0xc] sm:$0xf]
        %v344 = vld [vmem:[%s2] sm:$0xff]
        %v345 = vld [vmem:[%s2 + $0x8] sm:$0xff]
        %v346 = vld [vmem:[%s2 + $0x10] sm:$0xff]
        %v347 = vld [vmem:[%s2 + $0x18] sm:$0xff]
        %349 = vset.pattern.permute.xlu0 0
        %350 = vperm.xlu0 %349, %v344
        %v351 = vpop.permute.xlu0 %350
        %354 = vset.pattern.permute.xlu0 0
        %355 = vperm.xlu0 %354, %v345
        %v356 = vpop.permute.xlu0 %355
        %359 = vset.pattern.permute.xlu0 0
        %360 = vperm.xlu0 %359, %v346
        %v361 = vpop.permute.xlu0 %360
        %364 = vset.pattern.permute.xlu0 0
        %365 = vperm.xlu0 %364, %v347
        %v366 = vpop.permute.xlu0 %365
        %v372 = vunpack.c.l.b16 %v340
        %v373 = vunpack.c.l.b16 %v341
        %v374 = vunpack.c.l.b16 %v342
        %v375 = vunpack.c.l.b16 %v343
        %v376 = vpack.c.b16 %v373, %v372
        %v377 = vpack.c.b16 %v375, %v374
        %379 = vst [vmem:[#allocation1] ss:$4 sm:$0xff] %v339
        %v380 = vld.sshfl [vmem:[#allocation1] sm:$0xff pattern:$0x73625140]
        %v381 = vld.sshfl [vmem:[#allocation1 + $0x8] sm:$0xff pattern:$0x73625140]
        %vm382 = vcmask 31744
        %v384 = vsel %vm382, %v376, 0
        %v387 = vsel %vm382, %v377, 0
        %vm389 = vcmask 1041408
        %v390 = vsel %vm389, %v380, 0
        %v392 = vsel %vm389, %v381, 0
        %394 = vmatpush.bf16.msra.mxu0 0
        %395 = vmatpush.bf16.msra.mxu0 0
        %396 = vmatpush.bf16.msra.mxu0 0
        %397 = vmatpush.bf16.msra.mxu0 0
        %398 = vmatpush.bf16.msra.mxu0 0
        %399 = vmatpush.bf16.msra.mxu0 0
        %400 = vmatpush.bf16.msra.mxu0 0
        %401 = vmatpush.bf16.msra.mxu0 %v390
        %402 = vmatmul.bf16.gmra.mxu0 %v384
        %v403 = vpop.f32.mrf.mxu0
        %v404 = vadd.f32 %v351, %v403
        %v405 = vpop.f32.mrf.mxu0
        %v406 = vadd.f32 %v356, %v405
        %407 = vmatmul.bf16.gmra.mxu0 %v387
        %v408 = vpop.f32.mrf.mxu0
        %v409 = vadd.f32 %v361, %v408
        %v410 = vpop.f32.mrf.mxu0
        %v411 = vadd.f32 %v366, %v410
        %412 = vdwg.mxu0
        %413 = vmatpush.bf16.msra.mxu0 0
        %414 = vmatpush.bf16.msra.mxu0 0
        %415 = vmatpush.bf16.msra.mxu0 0
        %416 = vmatpush.bf16.msra.mxu0 0
        %417 = vmatpush.bf16.msra.mxu0 0
        %418 = vmatpush.bf16.msra.mxu0 0
        %419 = vmatpush.bf16.msra.mxu0 0
        %420 = vmatpush.bf16.msra.mxu0 %v392
        %421 = vmatmul.bf16.gmra.mxu0 %v384
        %v422 = vpop.f32.mrf.mxu0
        %v423 = vadd.f32 %v351, %v422
        %v424 = vpop.f32.mrf.mxu0
        %v425 = vadd.f32 %v356, %v424
        %426 = vmatmul.bf16.gmra.mxu0 %v387
        %v427 = vpop.f32.mrf.mxu0
        %v428 = vadd.f32 %v361, %v427
        %v429 = vpop.f32.mrf.mxu0
        %v430 = vadd.f32 %v366, %v429
        %431 = vdwg.mxu0
        %v432 = vpack.c.bf16 %v406, %v404
        %v433 = vpack.c.bf16 %v425, %v423
        %v434 = vpack.c.bf16 %v411, %v409
        %v435 = vpack.c.bf16 %v430, %v428
        %v436 = vld [vmem:[#allocation2] sm:$0xf]
        %v437 = vld [vmem:[#allocation2 + $0x4] sm:$0xf]
        %v438 = vld [vmem:[#allocation2 + $0x8] sm:$0xf]
        %v439 = vld [vmem:[#allocation2 + $0xc] sm:$0xf]
        %v440 = vld [vmem:[%s4] sm:$0xff]
        %v441 = vld [vmem:[%s4 + $0x8] sm:$0xff]
        %v442 = vld [vmem:[%s4 + $0x10] sm:$0xff]
        %v443 = vld [vmem:[%s4 + $0x18] sm:$0xff]
        %445 = vset.pattern.permute.xlu0 0
        %446 = vperm.xlu0 %445, %v440
        %v447 = vpop.permute.xlu0 %446
        %450 = vset.pattern.permute.xlu0 0
        %451 = vperm.xlu0 %450, %v441
        %v452 = vpop.permute.xlu0 %451
        %455 = vset.pattern.permute.xlu0 0
        %456 = vperm.xlu0 %455, %v442
        %v457 = vpop.permute.xlu0 %456
        %460 = vset.pattern.permute.xlu0 0
        %461 = vperm.xlu0 %460, %v443
        %v462 = vpop.permute.xlu0 %461
        %v468 = vunpack.c.l.b16 %v436
        %v469 = vunpack.c.l.b16 %v437
        %v470 = vunpack.c.l.b16 %v438
        %v471 = vunpack.c.l.b16 %v439
        %v472 = vpack.c.b16 %v469, %v468
        %v473 = vpack.c.b16 %v471, %v470
        %vm474 = vcmask 261120
        %v476 = vsel %vm474, %v472, 0
        %v479 = vsel %vm474, %v473, 0
        %481 = vmatpush.bf16.msra.mxu0 0
        %482 = vmatpush.bf16.msra.mxu0 0
        %483 = vmatpush.bf16.msra.mxu0 0
        %484 = vmatpush.bf16.msra.mxu0 0
        %485 = vmatpush.bf16.msra.mxu0 0
        %486 = vmatpush.bf16.msra.mxu0 0
        %487 = vmatpush.bf16.msra.mxu0 %v434
        %488 = vmatpush.bf16.msra.mxu0 %v432
        %489 = vmatmul.bf16.gmra.mxu0 %v476
        %v490 = vpop.f32.mrf.mxu0
        %v491 = vadd.f32 %v447, %v490
        %v492 = vpop.f32.mrf.mxu0
        %v493 = vadd.f32 %v452, %v492
        %494 = vmatmul.bf16.gmra.mxu0 %v479
        %v495 = vpop.f32.mrf.mxu0
        %v496 = vadd.f32 %v457, %v495
        %v497 = vpop.f32.mrf.mxu0
        %v498 = vadd.f32 %v462, %v497
        %499 = vdwg.mxu0
        %500 = vmatpush.bf16.msra.mxu0 0
        %501 = vmatpush.bf16.msra.mxu0 0
        %502 = vmatpush.bf16.msra.mxu0 0
        %503 = vmatpush.bf16.msra.mxu0 0
        %504 = vmatpush.bf16.msra.mxu0 0
        %505 = vmatpush.bf16.msra.mxu0 0
        %506 = vmatpush.bf16.msra.mxu0 %v435
        %507 = vmatpush.bf16.msra.mxu0 %v433
        %508 = vmatmul.bf16.gmra.mxu0 %v476
        %v509 = vpop.f32.mrf.mxu0
        %v510 = vadd.f32 %v447, %v509
        %v511 = vpop.f32.mrf.mxu0
        %v512 = vadd.f32 %v452, %v511
        %513 = vmatmul.bf16.gmra.mxu0 %v479
        %v514 = vpop.f32.mrf.mxu0
        %v515 = vadd.f32 %v457, %v514
        %v516 = vpop.f32.mrf.mxu0
        %v517 = vadd.f32 %v462, %v516
        %518 = vdwg.mxu0
        %v519 = vmax.f32 %v491, 0.0
        %v520 = vmax.f32 %v510, 0.0
        %v521 = vmax.f32 %v493, 0.0
        %v522 = vmax.f32 %v512, 0.0
        %v523 = vmax.f32 %v496, 0.0
        %v524 = vmax.f32 %v515, 0.0
        %v525 = vmax.f32 %v498, 0.0
        %v526 = vmax.f32 %v517, 0.0
        %v527 = vld [vmem:[#allocation4] sm:$0xf]
        %v528 = vld [vmem:[#allocation4 + $0x4] sm:$0xf]
        %v529 = vld [vmem:[#allocation4 + $0x8] sm:$0xf]
        %v530 = vld [vmem:[#allocation4 + $0xc] sm:$0xf]
        %v531 = vpack.c.bf16 %v521, %v519
        %v532 = vpack.c.bf16 %v522, %v520
        %v533 = vpack.c.bf16 %v525, %v523
        %v534 = vpack.c.bf16 %v526, %v524
        %v535 = vld [vmem:[%s6] sm:$0xff]
        %v536 = vld [vmem:[%s6 + $0x8] sm:$0xff]
        %v537 = vld [vmem:[%s6 + $0x10] sm:$0xff]
        %v538 = vld [vmem:[%s6 + $0x18] sm:$0xff]
        %540 = vset.pattern.permute.xlu0 0
        %541 = vperm.xlu0 %540, %v535
        %v542 = vpop.permute.xlu0 %541
        %545 = vset.pattern.permute.xlu0 0
        %546 = vperm.xlu0 %545, %v536
        %v547 = vpop.permute.xlu0 %546
        %550 = vset.pattern.permute.xlu0 0
        %551 = vperm.xlu0 %550, %v537
        %v552 = vpop.permute.xlu0 %551
        %555 = vset.pattern.permute.xlu0 0
        %556 = vperm.xlu0 %555, %v538
        %v557 = vpop.permute.xlu0 %556
        %v563 = vunpack.c.l.b16 %v527
        %v564 = vunpack.c.l.b16 %v528
        %v565 = vunpack.c.l.b16 %v529
        %v566 = vunpack.c.l.b16 %v530
        %v567 = vpack.c.b16 %v564, %v563
        %v568 = vpack.c.b16 %v566, %v565
        %v570 = vsel %vm474, %v567, 0
        %v573 = vsel %vm474, %v568, 0
        %575 = vmatpush.bf16.msra.mxu0 0
        %576 = vmatpush.bf16.msra.mxu0 0
        %577 = vmatpush.bf16.msra.mxu0 0
        %578 = vmatpush.bf16.msra.mxu0 0
        %579 = vmatpush.bf16.msra.mxu0 0
        %580 = vmatpush.bf16.msra.mxu0 0
        %581 = vmatpush.bf16.msra.mxu0 %v533
        %582 = vmatpush.bf16.msra.mxu0 %v531
        %583 = vmatmul.bf16.gmra.mxu0 %v570
        %v584 = vpop.f32.mrf.mxu0
        %v585 = vadd.f32 %v542, %v584
        %v586 = vpop.f32.mrf.mxu0
        %v587 = vadd.f32 %v547, %v586
        %588 = vmatmul.bf16.gmra.mxu0 %v573
        %v589 = vpop.f32.mrf.mxu0
        %v590 = vadd.f32 %v552, %v589
        %v591 = vpop.f32.mrf.mxu0
        %v592 = vadd.f32 %v557, %v591
        %593 = vdwg.mxu0
        %594 = vmatpush.bf16.msra.mxu0 0
        %595 = vmatpush.bf16.msra.mxu0 0
        %596 = vmatpush.bf16.msra.mxu0 0
        %597 = vmatpush.bf16.msra.mxu0 0
        %598 = vmatpush.bf16.msra.mxu0 0
        %599 = vmatpush.bf16.msra.mxu0 0
        %600 = vmatpush.bf16.msra.mxu0 %v534
        %601 = vmatpush.bf16.msra.mxu0 %v532
        %602 = vmatmul.bf16.gmra.mxu0 %v570
        %v603 = vpop.f32.mrf.mxu0
        %v604 = vadd.f32 %v542, %v603
        %v605 = vpop.f32.mrf.mxu0
        %v606 = vadd.f32 %v547, %v605
        %607 = vmatmul.bf16.gmra.mxu0 %v573
        %v608 = vpop.f32.mrf.mxu0
        %v609 = vadd.f32 %v552, %v608
        %v610 = vpop.f32.mrf.mxu0
        %v611 = vadd.f32 %v557, %v610
        %612 = vdwg.mxu0
        %v613 = vadd.f32 %v585, %v404
        %v614 = vadd.f32 %v604, %v423
        %v615 = vadd.f32 %v587, %v406
        %v616 = vadd.f32 %v606, %v425
        %v617 = vadd.f32 %v590, %v409
        %v618 = vadd.f32 %v609, %v428
        %v619 = vadd.f32 %v592, %v411
        %v620 = vadd.f32 %v611, %v430
        %v621 = vmax.f32 %v613, 0.0
        %v622 = vmax.f32 %v614, 0.0
        %v623 = vmax.f32 %v615, 0.0
        %v624 = vmax.f32 %v616, 0.0
        %v625 = vmax.f32 %v617, 0.0
        %v626 = vmax.f32 %v618, 0.0
        %v627 = vmax.f32 %v619, 0.0
        %v628 = vmax.f32 %v620, 0.0
        %v629 = vpack.c.bf16 %v622, %v621
        %v630 = vpack.c.bf16 %v624, %v623
        %v631 = vpack.c.bf16 %v626, %v625
        %v632 = vpack.c.bf16 %v628, %v627
        %633 = vst [vmem:[%s326] sm:$0xff] %v629
        %634 = vst [vmem:[%s326 + $0x8] sm:$0xff] %v630
        %635 = vst [vmem:[%s326 + $0x10] sm:$0xff] %v631
        %636 = vst [vmem:[%s326 + $0x18] sm:$0xff] %v632
        %s637 = sand.u32 %s196, 1
        %s638 = sand.u32 %s196, 1
        %s639 = smul.addr %s638, 32
        %s640 = scalar_lea.vmem [#allocation6], %s639
        // Predicated region
        $region57: #{_lambda_.4} parent=47 // pred_check
          %p641 = pneg %p206
        $region58: #{_lambda_.4} parent=47 // pred_check_branch
          %643 = sbr.rel (%p641) target = $region60
        $region59: #{_lambda_.4} parent=47 // pred_region
          %s644 = smul.u32 2, %s25
          %s645 = smul.addr %s24, 16
          %s646 = sadd.s32 %s644, %s645
          %s647 = smul.addr %s646, 4
          %s648 = scalar_lea.vmem %s7, %s647
          // Predicated region
          $region61: #{_lambda_.4} parent=59 // pred_check
            _
          $region62: #{_lambda_.4} parent=59 // pred_check_branch
            %650 = sbr.rel (0) target = $region64
          $region63: #{_lambda_.4} parent=59 // pred_region
            // Predicated region
            $region65: #{_lambda_.4} parent=63 // pred_check
              _
            $region66: #{_lambda_.4} parent=63 // pred_check_branch
              %652 = sbr.rel (0) target = $region68
            $region67: #{_lambda_.4} parent=63 // pred_region
              // Predicated region
              $region80: #{_lambda_.4} parent=67 // pred_check
                _
              $region81: #{_lambda_.4} parent=67 // pred_check_branch
                %674 = sbr.rel (0) target = $region83
              $region82: #{_lambda_.4} parent=67 // pred_region
                loop: start=0, step=1, limit=1
                $region84: #{_lambda_.4} parent=82 // loop_pre_header
                  _
                $region85: #{_lambda_.4} parent=82 // loop_header
                  %s676 = sphi 0, %s680
                  %p677 = scmp.ge.s32.totalorder %s676, 1
                  %s681 = sphi %s640, %s640
                  %s682 = sphi %s648, %s648
                $region86: #{_lambda_.4} parent=82 // loop_header_branch
                  %679 = sbr.rel (%p677) target = $region90
                $region87: #{_lambda_.4} parent=82 // loop_body
                  %v683 = vld [vmem:[%s681] sm:$0xff]
                  %684 = vst [vmem:[%s682] sm:$0xff] %v683
                  %v685 = vld [vmem:[%s681 + $0x8] sm:$0xff]
                  %686 = vst [vmem:[%s682 + $0x10] sm:$0xff] %v685
                  %v687 = vld [vmem:[%s681 + $0x10] sm:$0xff]
                  %688 = vst [vmem:[%s682 + $0x20] sm:$0xff] %v687
                  %v689 = vld [vmem:[%s681 + $0x18] sm:$0xff]
                  %690 = vst [vmem:[%s682 + $0x30] sm:$0xff] %v689
                $region88: #{_lambda_.4} parent=82 // loop_footer
                  %s680 = sadd.s32 1, %s676
                $region89: #{_lambda_.4} parent=82 // loop_footer_branch
                  %675 = sbr.rel target = $region85
                $region90: #{_lambda_.4} parent=82 // loop_exit
                  _
              $region83: #{_lambda_.4} parent=67 // pred_fallthru
                _
              // Predicated region
              $region91: #{_lambda_.4} parent=67 // pred_check
                _
              $region92: #{_lambda_.4} parent=67 // pred_check_branch
                %692 = sbr.rel target = $region94
              $region93: #{_lambda_.4} parent=67 // pred_region
                _
              $region94: #{_lambda_.4} parent=67 // pred_fallthru
                _
            $region68: #{_lambda_.4} parent=63 // pred_fallthru
              _
            // Predicated region
            $region69: #{_lambda_.4} parent=63 // pred_check
              _
            $region70: #{_lambda_.4} parent=63 // pred_check_branch
              %654 = sbr.rel target = $region72
            $region71: #{_lambda_.4} parent=63 // pred_region
              %s656 = ssub.s32 256, 1
              loop: start=0, step=1, limit=1
              $region73: #{_lambda_.4} parent=71 // loop_pre_header
                _
              $region74: #{_lambda_.4} parent=71 // loop_header
                %s658 = sphi 0, %s662
                %p659 = scmp.ge.s32.totalorder %s658, 1
                %s663 = sphi %s640, %s640
                %s664 = sphi %s648, %s648
              $region75: #{_lambda_.4} parent=71 // loop_header_branch
                %661 = sbr.rel (%p659) target = $region79
              $region76: #{_lambda_.4} parent=71 // loop_body
                %v665 = vld [vmem:[%s663] sm:%s656]
                %666 = vst [vmem:[%s664] sm:%s656] %v665
                %v667 = vld [vmem:[%s663 + $0x8] sm:%s656]
                %668 = vst [vmem:[%s664 + $0x10] sm:%s656] %v667
                %v669 = vld [vmem:[%s663 + $0x10] sm:%s656]
                %670 = vst [vmem:[%s664 + $0x20] sm:%s656] %v669
                %v671 = vld [vmem:[%s663 + $0x18] sm:%s656]
                %672 = vst [vmem:[%s664 + $0x30] sm:%s656] %v671
              $region77: #{_lambda_.4} parent=71 // loop_footer
                %s662 = sadd.s32 1, %s658
              $region78: #{_lambda_.4} parent=71 // loop_footer_branch
                %657 = sbr.rel target = $region74
              $region79: #{_lambda_.4} parent=71 // loop_exit
                _
            $region72: #{_lambda_.4} parent=63 // pred_fallthru
              _
          $region64: #{_lambda_.4} parent=59 // pred_fallthru
            _
          %693 = vnop
        $region60: #{_lambda_.4} parent=47 // pred_fallthru
          _
      $region48: #{_lambda_.4} parent=5 // pred_fallthru
        _
      %p694 = scmp.le.s32.totalorder 2, %s15
      // Predicated region
      $region95: #{_lambda_.4} parent=5 // pred_check
        %p695 = pneg %p694
      $region96: #{_lambda_.4} parent=5 // pred_check_branch
        %697 = sbr.rel (%p695) target = $region98
      $region97: #{_lambda_.4} parent=5 // pred_region
        %s698 = ssub.s32 %s15, 2
        // Predicated region
        $region99: #{_lambda_.4} parent=97 // pred_check
          %p699 = pneg %p212
        $region100: #{_lambda_.4} parent=97 // pred_check_branch
          %701 = sbr.rel (%p699) target = $region102
        $region101: #{_lambda_.4} parent=97 // pred_region
          %s702 = sand.u32 %s197, 1
          %s703 = sand.u32 %s197, 1
          %s704 = smul.addr %s703, 32
          %s705 = scalar_lea.vmem [#allocation6], %s704
        $region102: #{_lambda_.4} parent=97 // pred_fallthru
          _
      $region98: #{_lambda_.4} parent=5 // pred_fallthru
        _
    $region6: #{_lambda_.4} parent=1 // loop_footer
      %s19 = sadd.s32 1, %s15
    $region7: #{_lambda_.4} parent=1 // loop_footer_branch
      %14 = sbr.rel target = $region3
    $region8: #{_lambda_.4} parent=1 // loop_exit
      _
    %706 = vsyncpa [#allocation3], 1
    %s707 = scalar_lea.sflag [#allocation3], 1
    %708 = vsyncpa %s707, 1
    %709 = vsyncpa [#allocation5], 1

// kernel: custom-call.1
$region0: #{custom-call.1}
  %s0 = inlined_call_operand.hbm [shape: c64[4,4,4,32,32], index: 0, kind: input, shape index: {}]
  %s1 = inlined_call_operand.vmem [shape: f32[4,4,4,32,32], index: 1, kind: output, shape index: {}]
  %s2 = scalar_lea.hbm %s0, 2048
  $region1: #{custom-call.1} parent=0
    #allocation0 [shape = 's32[1]{0}', space=sflag, size = 0x4, scoped, tag = 'scoped memory for custom-call.1']
    %3 = vsyncpa [#allocation0], 0
    %s5 = sshll.u32 %s2, 4
    %s6 = int_to_ptr.hbm [resolvable:$true] %s5
    %s7 = sshll.u32 %s1, 4
    %s8 = int_to_ptr.vmem [resolvable:$true] %s7
    %10 = dma.hbm_to_vmem [thread:$0]  %s6, 32768, %s8, [#allocation0]
    %12 = dma.done [#allocation0], 32768
    %13 = vsyncpa [#allocation0], 1

// kernel: custom-call
$region0: #{custom-call}
  %s0 = inlined_call_operand.hbm [shape: c64[4,4,4,32,32], index: 0, kind: input, shape index: {}]
  %s1 = inlined_call_operand.vmem [shape: f32[4,4,4,32,32], index: 1, kind: output, shape index: {}]
  $region1: #{custom-call} parent=0
    #allocation0 [shape = 's32[1]{0}', space=sflag, size = 0x4, scoped, tag = 'scoped memory for custom-call']
    %2 = vsyncpa [#allocation0], 0
    %s4 = sshll.u32 %s0, 4
    %s5 = int_to_ptr.hbm [resolvable:$true] %s4
    %s6 = sshll.u32 %s1, 4
    %s7 = int_to_ptr.vmem [resolvable:$true] %s6
    %9 = dma.hbm_to_vmem [thread:$0]  %s5, 32768, %s7, [#allocation0]
    %11 = dma.done [#allocation0], 32768
    %12 = vsyncpa [#allocation0], 1

// kernel: reverse.4
$region0: #{reverse.4}
  #allocation0 [shape = 's32[1]{0}', space=sflag, size = 0x4, scoped, tag = 'scoped memory for reverse.4']
  %s0 = inlined_call_operand.vmem [shape: f32[2,32,8,8,3], index: 0, kind: input, shape index: {}]
  %s1 = inlined_call_operand.vmem [shape: f32[2,32,8,8,3], index: 1, kind: output, shape index: {}]
  %s2 = scalar_lea.vmem %s0, 128
  %v3 = vld [vmem:[%s2] sm:$0xff]
  %4 = vst [vmem:[%s1] sm:$0xff] %v3
  %s5 = scalar_lea.vmem %s0, 320
  %v6 = vld [vmem:[%s5] sm:$0xff]
  %s7 = scalar_lea.vmem %s1, 192
  %8 = vst [vmem:[%s7] sm:$0xff] %v6
  %s9 = scalar_lea.vmem %s0, 64
  %v10 = vld [vmem:[%s9] sm:$0xff]
  %s11 = scalar_lea.vmem %s1, 64
  %12 = vst [vmem:[%s11] sm:$0xff] %v10
  %s13 = scalar_lea.vmem %s0, 256
  %v14 = vld [vmem:[%s13] sm:$0xff]
  %s15 = scalar_lea.vmem %s1, 256
  %16 = vst [vmem:[%s15] sm:$0xff] %v14
  %v17 = vld [vmem:[%s0] sm:$0xff]
  %s18 = scalar_lea.vmem %s1, 128
  %19 = vst [vmem:[%s18] sm:$0xff] %v17
  %s20 = scalar_lea.vmem %s0, 192
  %v21 = vld [vmem:[%s20] sm:$0xff]
  %s22 = scalar_lea.vmem %s1, 320
  %23 = vst [vmem:[%s22] sm:$0xff] %v21
  %s24 = scalar_lea.vmem %s0, 136
  %v25 = vld [vmem:[%s24] sm:$0xff]
  %s26 = scalar_lea.vmem %s1, 8
  %27 = vst [vmem:[%s26] sm:$0xff] %v25
  %s28 = scalar_lea.vmem %s0, 328
  %v29 = vld [vmem:[%s28] sm:$0xff]
  %s30 = scalar_lea.vmem %s1, 200
  %31 = vst [vmem:[%s30] sm:$0xff] %v29
  %s32 = scalar_lea.vmem %s0, 72
  %v33 = vld [vmem:[%s32] sm:$0xff]
  %s34 = scalar_lea.vmem %s1, 72
  %35 = vst [vmem:[%s34] sm:$0xff] %v33
  %s36 = scalar_lea.vmem %s0, 264
  %v37 = vld [vmem:[%s36] sm:$0xff]
  %s38 = scalar_lea.vmem %s1, 264
  %39 = vst [vmem:[%s38] sm:$0xff] %v37
  %s40 = scalar_lea.vmem %s0, 8
  %v41 = vld [vmem:[%s40] sm:$0xff]
  %s42 = scalar_lea.vmem %s1, 136
  %43 = vst [vmem:[%s42] sm:$0xff] %v41
  %s44 = scalar_lea.vmem %s0, 200
  %v45 = vld [vmem:[%s44] sm:$0xff]
  %s46 = scalar_lea.vmem %s1, 328
  %47 = vst [vmem:[%s46] sm:$0xff] %v45
  %s48 = scalar_lea.vmem %s0, 144
  %v49 = vld [vmem:[%s48] sm:$0xff]
  %s50 = scalar_lea.vmem %s1, 16
  %51 = vst [vmem:[%s50] sm:$0xff] %v49
  %s52 = scalar_lea.vmem %s0, 336
  %v53 = vld [vmem:[%s52] sm:$0xff]
  %s54 = scalar_lea.vmem %s1, 208
  %55 = vst [vmem:[%s54] sm:$0xff] %v53
  %s56 = scalar_lea.vmem %s0, 80
  %v57 = vld [vmem:[%s56] sm:$0xff]
  %s58 = scalar_lea.vmem %s1, 80
  %59 = vst [vmem:[%s58] sm:$0xff] %v57
  %s60 = scalar_lea.vmem %s0, 272
  %v61 = vld [vmem:[%s60] sm:$0xff]
  %s62 = scalar_lea.vmem %s1, 272
  %63 = vst [vmem:[%s62] sm:$0xff] %v61
  %s64 = scalar_lea.vmem %s0, 16
  %v65 = vld [vmem:[%s64] sm:$0xff]
  %s66 = scalar_lea.vmem %s1, 144
  %67 = vst [vmem:[%s66] sm:$0xff] %v65
  %s68 = scalar_lea.vmem %s0, 208
  %v69 = vld [vmem:[%s68] sm:$0xff]
  %s70 = scalar_lea.vmem %s1, 336
  %71 = vst [vmem:[%s70] sm:$0xff] %v69
  %s72 = scalar_lea.vmem %s0, 152
  %v73 = vld [vmem:[%s72] sm:$0xff]
  %s74 = scalar_lea.vmem %s1, 24
  %75 = vst [vmem:[%s74] sm:$0xff] %v73
  %s76 = scalar_lea.vmem %s0, 344
  %v77 = vld [vmem:[%s76] sm:$0xff]
  %s78 = scalar_lea.vmem %s1, 216
  %79 = vst [vmem:[%s78] sm:$0xff] %v77
  %s80 = scalar_lea.vmem %s0, 88
  %v81 = vld [vmem:[%s80] sm:$0xff]
  %s82 = scalar_lea.vmem %s1, 88
  %83 = vst [vmem:[%s82] sm:$0xff] %v81
  %s84 = scalar_lea.vmem %s0, 280
  %v85 = vld [vmem:[%s84] sm:$0xff]
  %s86 = scalar_lea.vmem %s1, 280
  %87 = vst [vmem:[%s86] sm:$0xff] %v85
  %s88 = scalar_lea.vmem %s0, 24
  %v89 = vld [vmem:[%s88] sm:$0xff]
  %s90 = scalar_lea.vmem %s1, 152
  %91 = vst [vmem:[%s90] sm:$0xff] %v89
  %s92 = scalar_lea.vmem %s0, 216
  %v93 = vld [vmem:[%s92] sm:$0xff]
  %s94 = scalar_lea.vmem %s1, 344
  %95 = vst [vmem:[%s94] sm:$0xff] %v93
  %s96 = scalar_lea.vmem %s0, 160
  %v97 = vld [vmem:[%s96] sm:$0xff]
  %s98 = scalar_lea.vmem %s1, 32
  %99 = vst [vmem:[%s98] sm:$0xff] %v97
  %s100 = scalar_lea.vmem %s0, 352
  %v101 = vld [vmem:[%s100] sm:$0xff]
  %s102 = scalar_lea.vmem %s1, 224
  %103 = vst [vmem:[%s102] sm:$0xff] %v101
  %s104 = scalar_lea.vmem %s0, 96
  %v105 = vld [vmem:[%s104] sm:$0xff]
  %s106 = scalar_lea.vmem %s1, 96
  %107 = vst [vmem:[%s106] sm:$0xff] %v105
  %s108 = scalar_lea.vmem %s0, 288
  %v109 = vld [vmem:[%s108] sm:$0xff]
  %s110 = scalar_lea.vmem %s1, 288
  %111 = vst [vmem:[%s110] sm:$0xff] %v109
  %s112 = scalar_lea.vmem %s0, 32
  %v113 = vld [vmem:[%s112] sm:$0xff]
  %s114 = scalar_lea.vmem %s1, 160
  %115 = vst [vmem:[%s114] sm:$0xff] %v113
  %s116 = scalar_lea.vmem %s0, 224
  %v117 = vld [vmem:[%s116] sm:$0xff]
  %s118 = scalar_lea.vmem %s1, 352
  %119 = vst [vmem:[%s118] sm:$0xff] %v117
  %s120 = scalar_lea.vmem %s0, 168
  %v121 = vld [vmem:[%s120] sm:$0xff]
  %s122 = scalar_lea.vmem %s1, 40
  %123 = vst [vmem:[%s122] sm:$0xff] %v121
  %s124 = scalar_lea.vmem %s0, 360
  %v125 = vld [vmem:[%s124] sm:$0xff]
  %s126 = scalar_lea.vmem %s1, 232
  %127 = vst [vmem:[%s126] sm:$0xff] %v125
  %s128 = scalar_lea.vmem %s0, 104
  %v129 = vld [vmem:[%s128] sm:$0xff]
  %s130 = scalar_lea.vmem %s1, 104
  %131 = vst [vmem:[%s130] sm:$0xff] %v129
  %s132 = scalar_lea.vmem %s0, 296
  %v133 = vld [vmem:[%s132] sm:$0xff]
  %s134 = scalar_lea.vmem %s1, 296
  %135 = vst [vmem:[%s134] sm:$0xff] %v133
  %s136 = scalar_lea.vmem %s0, 40
  %v137 = vld [vmem:[%s136] sm:$0xff]
  %s138 = scalar_lea.vmem %s1, 168
  %139 = vst [vmem:[%s138] sm:$0xff] %v137
  %s140 = scalar_lea.vmem %s0, 232
  %v141 = vld [vmem:[%s140] sm:$0xff]
  %s142 = scalar_lea.vmem %s1, 360
  %143 = vst [vmem:[%s142] sm:$0xff] %v141
  %s144 = scalar_lea.vmem %s0, 176
  %v145 = vld [vmem:[%s144] sm:$0xff]
  %s146 = scalar_lea.vmem %s1, 48
  %147 = vst [vmem:[%s146] sm:$0xff] %v145
  %s148 = scalar_lea.vmem %s0, 368
  %v149 = vld [vmem:[%s148] sm:$0xff]
  %s150 = scalar_lea.vmem %s1, 240
  %151 = vst [vmem:[%s150] sm:$0xff] %v149
  %s152 = scalar_lea.vmem %s0, 112
  %v153 = vld [vmem:[%s152] sm:$0xff]
  %s154 = scalar_lea.vmem %s1, 112
  %155 = vst [vmem:[%s154] sm:$0xff] %v153
  %s156 = scalar_lea.vmem %s0, 304
  %v157 = vld [vmem:[%s156] sm:$0xff]
  %s158 = scalar_lea.vmem %s1, 304
  %159 = vst [vmem:[%s158] sm:$0xff] %v157
  %s160 = scalar_lea.vmem %s0, 48
  %v161 = vld [vmem:[%s160] sm:$0xff]
  %s162 = scalar_lea.vmem %s1, 176
  %163 = vst [vmem:[%s162] sm:$0xff] %v161
  %s164 = scalar_lea.vmem %s0, 240
  %v165 = vld [vmem:[%s164] sm:$0xff]
  %s166 = scalar_lea.vmem %s1, 368
  %167 = vst [vmem:[%s166] sm:$0xff] %v165
  %s168 = scalar_lea.vmem %s0, 184
  %v169 = vld [vmem:[%s168] sm:$0xff]
  %s170 = scalar_lea.vmem %s1, 56
  %171 = vst [vmem:[%s170] sm:$0xff] %v169
  %s172 = scalar_lea.vmem %s0, 376
  %v173 = vld [vmem:[%s172] sm:$0xff]
  %s174 = scalar_lea.vmem %s1, 248
  %175 = vst [vmem:[%s174] sm:$0xff] %v173
  %s176 = scalar_lea.vmem %s0, 120
  %v177 = vld [vmem:[%s176] sm:$0xff]
  %s178 = scalar_lea.vmem %s1, 120
  %179 = vst [vmem:[%s178] sm:$0xff] %v177
  %s180 = scalar_lea.vmem %s0, 312
  %v181 = vld [vmem:[%s180] sm:$0xff]
  %s182 = scalar_lea.vmem %s1, 312
  %183 = vst [vmem:[%s182] sm:$0xff] %v181
  %s184 = scalar_lea.vmem %s0, 56
  %v185 = vld [vmem:[%s184] sm:$0xff]
  %s186 = scalar_lea.vmem %s1, 184
  %187 = vst [vmem:[%s186] sm:$0xff] %v185
  %s188 = scalar_lea.vmem %s0, 248
  %v189 = vld [vmem:[%s188] sm:$0xff]
  %s190 = scalar_lea.vmem %s1, 376
  %191 = vst [vmem:[%s190] sm:$0xff] %v189

// kernel: _lambda_.5
$region0: #{_lambda_.5}
  #allocation0 [shape = 'u32[]', space=smem, size = 0x4, offset = 0x4, fixed_abs, tag = 'smem constant byte address 0x4 - core index']
  #allocation1 [shape = 'u32[72,128]{1,0:T(1,128)}', space=vmem, size = 0x9000, scoped, tag = 'internal scratch']
  %s0 = inlined_call_operand.vmem [shape: bf16[2,32,512], index: 0, kind: input, shape index: {}]
  %s1 = inlined_call_operand.vmem [shape: bf16[2,32,512], index: 1, kind: input, shape index: {}]
  %s2 = inlined_call_operand.vmem [shape: bf16[32,32], index: 2, kind: input, shape index: {}]
  %s3 = inlined_call_operand.vmem [shape: f32[32,1], index: 3, kind: input, shape index: {}]
  %s4 = inlined_call_operand.vmem [shape: bf16[2,32,512], index: 4, kind: output, shape index: {}]
  %s5 = sld [smem:[#allocation0]]
  $region159: #{_lambda_.5} parent=0
    _
  %s7 = ssub.s32 1, %s5
  %s8 = scalar_select 0, %s7, %s5
  $region1: #{_lambda_.5} parent=0
    #allocation2 [shape = 'u8[32768]{0}', space=vmem, size = 0x8000, scoped, tag = 'input window, operand 0']
    #allocation3 [shape = 'u8[32768]{0}', space=vmem, size = 0x8000, scoped, tag = 'input window, operand 1']
    #allocation4 [shape = 'u8[32768]{0}', space=vmem, size = 0x8000, scoped, tag = 'output window, operand 0']
    loop: start=0, step=1, limit=6
    $region2: #{_lambda_.5} parent=1 // loop_pre_header
      _
    $region3: #{_lambda_.5} parent=1 // loop_header
      %s10 = sphi 0, %s14
      %p11 = scmp.ge.s32.totalorder %s10, 6
      %s17 = sphi 0, %s29
      %s18 = sphi 0, %s25
      %s19 = sphi 0, %s17
      %s20 = sphi 0, %s18
      %s21 = sphi 0, %s19
      %s22 = sphi 0, %s20
      %s34 = sphi 0, %s36
      %s37 = sphi 0, %s34
      %s38 = sphi 0, %s37
      %s54 = sphi 0, %s38
      %s62 = sphi 0, %s64
      %s65 = sphi 0, %s62
      %s66 = sphi 0, %s65
      %s82 = sphi 0, %s66
      %s86 = sphi 0, %s86
      %s88 = sphi 0, %s86
      %s89 = sphi 0, %s88
      %s103 = sphi 0, %s89
      %s107 = sphi 0, %s107
      %s109 = sphi 0, %s107
      %s110 = sphi 0, %s109
      %s124 = sphi 0, %s110
      %s132 = sphi 0, %s134
      %s135 = sphi 0, %s132
      %s136 = sphi 0, %s135
      %s152 = sphi 0, %s136
    $region4: #{_lambda_.5} parent=1 // loop_header_branch
      %13 = sbr.rel (%p11) target = $region8
    $region5: #{_lambda_.5} parent=1 // loop_body
      %s15 = ssub.s32 %s10, 1
      %s16 = ssub.s32 %s10, 2
      %s23 = sadd.s32 1, %s18
      %p24 = scmp.ge.s32.totalorder %s23, 2
      %s25 = scalar_select %p24, 0, %s23
      %s26 = sadd.s32 1, %s17
      %s27 = scalar_select %p24, %s26, %s17
      %p28 = scmp.ge.s32.totalorder %s27, 2
      %s29 = scalar_select %p28, 0, %s27
      %s30 = ssub.s32 %s17, %s29
      %s31 = ssub.s32 %s18, %s25
      %s32 = sor.u32 %s30, %s31
      %p33 = scmp.eq.s32.totalorder %s32, 0
      %s35 = sadd.s32 %s34, 1
      %s36 = scalar_select %p33, %s34, %s35
      %p39 = pneg %p33
      %p40 = scmp.eq.s32.totalorder %s10, 3
      %p41 = por %p39, %p40
      %p42 = scmp.ne.s32.totalorder %s34, %s37
      %p43 = scmp.eq.s32.totalorder %s10, 0
      %p44 = por %p42, %p43
      %p45 = scmp.ne.s32.totalorder %s34, %s37
      %p46 = scmp.eq.s32.totalorder %s15, 3
      %p47 = por %p45, %p46
      %p48 = scmp.ne.s32.totalorder %s37, %s38
      %p49 = scmp.eq.s32.totalorder %s15, 0
      %p50 = por %p48, %p49
      %p51 = scmp.ne.s32.totalorder %s37, %s38
      %p52 = scmp.eq.s32.totalorder %s16, 3
      %p53 = por %p51, %p52
      %p55 = scmp.ne.s32.totalorder %s38, %s54
      %p56 = scmp.eq.s32.totalorder %s16, 0
      %p57 = por %p55, %p56
      %s58 = ssub.s32 %s17, %s29
      %s59 = ssub.s32 %s18, %s25
      %s60 = sor.u32 %s58, %s59
      %p61 = scmp.eq.s32.totalorder %s60, 0
      %s63 = sadd.s32 %s62, 1
      %s64 = scalar_select %p61, %s62, %s63
      %p67 = pneg %p61
      %p68 = scmp.eq.s32.totalorder %s10, 3
      %p69 = por %p67, %p68
      %p70 = scmp.ne.s32.totalorder %s62, %s65
      %p71 = scmp.eq.s32.totalorder %s10, 0
      %p72 = por %p70, %p71
      %p73 = scmp.ne.s32.totalorder %s62, %s65
      %p74 = scmp.eq.s32.totalorder %s15, 3
      %p75 = por %p73, %p74
      %p76 = scmp.ne.s32.totalorder %s65, %s66
      %p77 = scmp.eq.s32.totalorder %s15, 0
      %p78 = por %p76, %p77
      %p79 = scmp.ne.s32.totalorder %s65, %s66
      %p80 = scmp.eq.s32.totalorder %s16, 3
      %p81 = por %p79, %p80
      %p83 = scmp.ne.s32.totalorder %s66, %s82
      %p84 = scmp.eq.s32.totalorder %s16, 0
      %p85 = por %p83, %p84
      %s87 = sadd.s32 %s86, 1
      %p90 = scmp.eq.s32.totalorder %s10, 3
      %p91 = scmp.ne.s32.totalorder %s86, %s88
      %p92 = scmp.eq.s32.totalorder %s10, 0
      %p93 = por %p91, %p92
      %p94 = scmp.ne.s32.totalorder %s86, %s88
      %p95 = scmp.eq.s32.totalorder %s15, 3
      %p96 = por %p94, %p95
      %p97 = scmp.ne.s32.totalorder %s88, %s89
      %p98 = scmp.eq.s32.totalorder %s15, 0
      %p99 = por %p97, %p98
      %p100 = scmp.ne.s32.totalorder %s88, %s89
      %p101 = scmp.eq.s32.totalorder %s16, 3
      %p102 = por %p100, %p101
      %p104 = scmp.ne.s32.totalorder %s89, %s103
      %p105 = scmp.eq.s32.totalorder %s16, 0
      %p106 = por %p104, %p105
      %s108 = sadd.s32 %s107, 1
      %p111 = scmp.eq.s32.totalorder %s10, 3
      %p112 = scmp.ne.s32.totalorder %s107, %s109
      %p113 = scmp.eq.s32.totalorder %s10, 0
      %p114 = por %p112, %p113
      %p115 = scmp.ne.s32.totalorder %s107, %s109
      %p116 = scmp.eq.s32.totalorder %s15, 3
      %p117 = por %p115, %p116
      %p118 = scmp.ne.s32.totalorder %s109, %s110
      %p119 = scmp.eq.s32.totalorder %s15, 0
      %p120 = por %p118, %p119
      %p121 = scmp.ne.s32.totalorder %s109, %s110
      %p122 = scmp.eq.s32.totalorder %s16, 3
      %p123 = por %p121, %p122
      %p125 = scmp.ne.s32.totalorder %s110, %s124
      %p126 = scmp.eq.s32.totalorder %s16, 0
      %p127 = por %p125, %p126
      %s128 = ssub.s32 %s17, %s29
      %s129 = ssub.s32 %s18, %s25
      %s130 = sor.u32 %s128, %s129
      %p131 = scmp.eq.s32.totalorder %s130, 0
      %s133 = sadd.s32 %s132, 1
      %s134 = scalar_select %p131, %s132, %s133
      %p137 = pneg %p131
      %p138 = scmp.eq.s32.totalorder %s10, 3
      %p139 = por %p137, %p138
      %p140 = scmp.ne.s32.totalorder %s132, %s135
      %p141 = scmp.eq.s32.totalorder %s10, 0
      %p142 = por %p140, %p141
      %p143 = scmp.ne.s32.totalorder %s132, %s135
      %p144 = scmp.eq.s32.totalorder %s15, 3
      %p145 = por %p143, %p144
      %p146 = scmp.ne.s32.totalorder %s135, %s136
      %p147 = scmp.eq.s32.totalorder %s15, 0
      %p148 = por %p146, %p147
      %p149 = scmp.ne.s32.totalorder %s135, %s136
      %p150 = scmp.eq.s32.totalorder %s16, 3
      %p151 = por %p149, %p150
      %p153 = scmp.ne.s32.totalorder %s136, %s152
      %p154 = scmp.eq.s32.totalorder %s16, 0
      %p155 = por %p153, %p154
      %p156 = scmp.le.s32.totalorder 1, %s10
      %p157 = scmp.lt.s32.totalorder %s10, 5
      %p158 = pnand %p156, %p157
      %p159 = pneg %p158
      // Predicated region
      $region9: #{_lambda_.5} parent=5 // pred_check
        _
      $region10: #{_lambda_.5} parent=5 // pred_check_branch
        %161 = sbr.rel (%p158) target = $region12
      $region11: #{_lambda_.5} parent=5 // pred_region
        %s162 = ssub.s32 %s10, 1
        // Predicated region
        $region13: #{_lambda_.5} parent=11 // pred_check
          %p163 = pneg %p99
        $region14: #{_lambda_.5} parent=11 // pred_check_branch
          %165 = sbr.rel (%p163) target = $region16
        $region15: #{_lambda_.5} parent=11 // pred_region
          _
        $region16: #{_lambda_.5} parent=11 // pred_fallthru
          _
        // Predicated region
        $region17: #{_lambda_.5} parent=11 // pred_check
          %p166 = pneg %p120
        $region18: #{_lambda_.5} parent=11 // pred_check_branch
          %168 = sbr.rel (%p166) target = $region20
        $region19: #{_lambda_.5} parent=11 // pred_region
          _
        $region20: #{_lambda_.5} parent=11 // pred_fallthru
          _
      $region12: #{_lambda_.5} parent=5 // pred_fallthru
        _
      %p169 = scmp.lt.s32.totalorder %s10, 4
      // Predicated region
      $region21: #{_lambda_.5} parent=5 // pred_check
        %p170 = pneg %p169
      $region22: #{_lambda_.5} parent=5 // pred_check_branch
        %172 = sbr.rel (%p170) target = $region24
      $region23: #{_lambda_.5} parent=5 // pred_region
        // Predicated region
        $region25: #{_lambda_.5} parent=23 // pred_check
          %p173 = pneg %p44
        $region26: #{_lambda_.5} parent=23 // pred_check_branch
          %175 = sbr.rel (%p173) target = $region28
        $region27: #{_lambda_.5} parent=23 // pred_region
          %s176 = sand.u32 %s34, 1
          %s177 = sand.u32 %s34, 1
          %s178 = smul.addr %s177, 32
          %s179 = scalar_lea.vmem [#allocation2], %s178
          %s180 = smul.u32 2, %s18
          %s181 = smul.addr %s17, 16
          %s182 = sadd.s32 %s180, %s181
          %s183 = smul.addr %s182, 4
          %s184 = scalar_lea.vmem %s0, %s183
          // Predicated region
          $region29: #{_lambda_.5} parent=27 // pred_check
            _
          $region30: #{_lambda_.5} parent=27 // pred_check_branch
            %186 = sbr.rel (0) target = $region32
          $region31: #{_lambda_.5} parent=27 // pred_region
            // Predicated region
            $region33: #{_lambda_.5} parent=31 // pred_check
              _
            $region34: #{_lambda_.5} parent=31 // pred_check_branch
              %188 = sbr.rel (0) target = $region36
            $region35: #{_lambda_.5} parent=31 // pred_region
              // Predicated region
              $region48: #{_lambda_.5} parent=35 // pred_check
                _
              $region49: #{_lambda_.5} parent=35 // pred_check_branch
                %210 = sbr.rel (0) target = $region51
              $region50: #{_lambda_.5} parent=35 // pred_region
                loop: start=0, step=1, limit=1
                $region52: #{_lambda_.5} parent=50 // loop_pre_header
                  _
                $region53: #{_lambda_.5} parent=50 // loop_header
                  %s212 = sphi 0, %s216
                  %p213 = scmp.ge.s32.totalorder %s212, 1
                  %s217 = sphi %s184, %s184
                  %s218 = sphi %s179, %s179
                $region54: #{_lambda_.5} parent=50 // loop_header_branch
                  %215 = sbr.rel (%p213) target = $region58
                $region55: #{_lambda_.5} parent=50 // loop_body
                  %v219 = vld [vmem:[%s217] sm:$0xff]
                  %220 = vst [vmem:[%s218] sm:$0xff] %v219
                  %v221 = vld [vmem:[%s217 + $0x10] sm:$0xff]
                  %222 = vst [vmem:[%s218 + $0x8] sm:$0xff] %v221
                  %v223 = vld [vmem:[%s217 + $0x20] sm:$0xff]
                  %224 = vst [vmem:[%s218 + $0x10] sm:$0xff] %v223
                  %v225 = vld [vmem:[%s217 + $0x30] sm:$0xff]
                  %226 = vst [vmem:[%s218 + $0x18] sm:$0xff] %v225
                $region56: #{_lambda_.5} parent=50 // loop_footer
                  %s216 = sadd.s32 1, %s212
                $region57: #{_lambda_.5} parent=50 // loop_footer_branch
                  %211 = sbr.rel target = $region53
                $region58: #{_lambda_.5} parent=50 // loop_exit
                  _
              $region51: #{_lambda_.5} parent=35 // pred_fallthru
                _
              // Predicated region
              $region59: #{_lambda_.5} parent=35 // pred_check
                _
              $region60: #{_lambda_.5} parent=35 // pred_check_branch
                %228 = sbr.rel target = $region62
              $region61: #{_lambda_.5} parent=35 // pred_region
                _
              $region62: #{_lambda_.5} parent=35 // pred_fallthru
                _
            $region36: #{_lambda_.5} parent=31 // pred_fallthru
              _
            // Predicated region
            $region37: #{_lambda_.5} parent=31 // pred_check
              _
            $region38: #{_lambda_.5} parent=31 // pred_check_branch
              %190 = sbr.rel target = $region40
            $region39: #{_lambda_.5} parent=31 // pred_region
              %s192 = ssub.s32 256, 1
              loop: start=0, step=1, limit=1
              $region41: #{_lambda_.5} parent=39 // loop_pre_header
                _
              $region42: #{_lambda_.5} parent=39 // loop_header
                %s194 = sphi 0, %s198
                %p195 = scmp.ge.s32.totalorder %s194, 1
                %s199 = sphi %s184, %s184
                %s200 = sphi %s179, %s179
              $region43: #{_lambda_.5} parent=39 // loop_header_branch
                %197 = sbr.rel (%p195) target = $region47
              $region44: #{_lambda_.5} parent=39 // loop_body
                %v201 = vld [vmem:[%s199] sm:%s192]
                %202 = vst [vmem:[%s200] sm:%s192] %v201
                %v203 = vld [vmem:[%s199 + $0x10] sm:%s192]
                %204 = vst [vmem:[%s200 + $0x8] sm:%s192] %v203
                %v205 = vld [vmem:[%s199 + $0x20] sm:%s192]
                %206 = vst [vmem:[%s200 + $0x10] sm:%s192] %v205
                %v207 = vld [vmem:[%s199 + $0x30] sm:%s192]
                %208 = vst [vmem:[%s200 + $0x18] sm:%s192] %v207
              $region45: #{_lambda_.5} parent=39 // loop_footer
                %s198 = sadd.s32 1, %s194
              $region46: #{_lambda_.5} parent=39 // loop_footer_branch
                %193 = sbr.rel target = $region42
              $region47: #{_lambda_.5} parent=39 // loop_exit
                _
            $region40: #{_lambda_.5} parent=31 // pred_fallthru
              _
          $region32: #{_lambda_.5} parent=27 // pred_fallthru
            _
          %229 = vnop
        $region28: #{_lambda_.5} parent=23 // pred_fallthru
          _
        // Predicated region
        $region63: #{_lambda_.5} parent=23 // pred_check
          %p230 = pneg %p72
        $region64: #{_lambda_.5} parent=23 // pred_check_branch
          %232 = sbr.rel (%p230) target = $region66
        $region65: #{_lambda_.5} parent=23 // pred_region
          %s233 = sand.u32 %s62, 1
          %s234 = sand.u32 %s62, 1
          %s235 = smul.addr %s234, 32
          %s236 = scalar_lea.vmem [#allocation3], %s235
          %s237 = smul.u32 2, %s18
          %s238 = smul.addr %s17, 16
          %s239 = sadd.s32 %s237, %s238
          %s240 = smul.addr %s239, 4
          %s241 = scalar_lea.vmem %s1, %s240
          // Predicated region
          $region67: #{_lambda_.5} parent=65 // pred_check
            _
          $region68: #{_lambda_.5} parent=65 // pred_check_branch
            %243 = sbr.rel (0) target = $region70
          $region69: #{_lambda_.5} parent=65 // pred_region
            // Predicated region
            $region71: #{_lambda_.5} parent=69 // pred_check
              _
            $region72: #{_lambda_.5} parent=69 // pred_check_branch
              %245 = sbr.rel (0) target = $region74
            $region73: #{_lambda_.5} parent=69 // pred_region
              // Predicated region
              $region86: #{_lambda_.5} parent=73 // pred_check
                _
              $region87: #{_lambda_.5} parent=73 // pred_check_branch
                %267 = sbr.rel (0) target = $region89
              $region88: #{_lambda_.5} parent=73 // pred_region
                loop: start=0, step=1, limit=1
                $region90: #{_lambda_.5} parent=88 // loop_pre_header
                  _
                $region91: #{_lambda_.5} parent=88 // loop_header
                  %s269 = sphi 0, %s273
                  %p270 = scmp.ge.s32.totalorder %s269, 1
                  %s274 = sphi %s241, %s241
                  %s275 = sphi %s236, %s236
                $region92: #{_lambda_.5} parent=88 // loop_header_branch
                  %272 = sbr.rel (%p270) target = $region96
                $region93: #{_lambda_.5} parent=88 // loop_body
                  %v276 = vld [vmem:[%s274] sm:$0xff]
                  %277 = vst [vmem:[%s275] sm:$0xff] %v276
                  %v278 = vld [vmem:[%s274 + $0x10] sm:$0xff]
                  %279 = vst [vmem:[%s275 + $0x8] sm:$0xff] %v278
                  %v280 = vld [vmem:[%s274 + $0x20] sm:$0xff]
                  %281 = vst [vmem:[%s275 + $0x10] sm:$0xff] %v280
                  %v282 = vld [vmem:[%s274 + $0x30] sm:$0xff]
                  %283 = vst [vmem:[%s275 + $0x18] sm:$0xff] %v282
                $region94: #{_lambda_.5} parent=88 // loop_footer
                  %s273 = sadd.s32 1, %s269
                $region95: #{_lambda_.5} parent=88 // loop_footer_branch
                  %268 = sbr.rel target = $region91
                $region96: #{_lambda_.5} parent=88 // loop_exit
                  _
              $region89: #{_lambda_.5} parent=73 // pred_fallthru
                _
              // Predicated region
              $region97: #{_lambda_.5} parent=73 // pred_check
                _
              $region98: #{_lambda_.5} parent=73 // pred_check_branch
                %285 = sbr.rel target = $region100
              $region99: #{_lambda_.5} parent=73 // pred_region
                _
              $region100: #{_lambda_.5} parent=73 // pred_fallthru
                _
            $region74: #{_lambda_.5} parent=69 // pred_fallthru
              _
            // Predicated region
            $region75: #{_lambda_.5} parent=69 // pred_check
              _
            $region76: #{_lambda_.5} parent=69 // pred_check_branch
              %247 = sbr.rel target = $region78
            $region77: #{_lambda_.5} parent=69 // pred_region
              %s249 = ssub.s32 256, 1
              loop: start=0, step=1, limit=1
              $region79: #{_lambda_.5} parent=77 // loop_pre_header
                _
              $region80: #{_lambda_.5} parent=77 // loop_header
                %s251 = sphi 0, %s255
                %p252 = scmp.ge.s32.totalorder %s251, 1
                %s256 = sphi %s241, %s241
                %s257 = sphi %s236, %s236
              $region81: #{_lambda_.5} parent=77 // loop_header_branch
                %254 = sbr.rel (%p252) target = $region85
              $region82: #{_lambda_.5} parent=77 // loop_body
                %v258 = vld [vmem:[%s256] sm:%s249]
                %259 = vst [vmem:[%s257] sm:%s249] %v258
                %v260 = vld [vmem:[%s256 + $0x10] sm:%s249]
                %261 = vst [vmem:[%s257 + $0x8] sm:%s249] %v260
                %v262 = vld [vmem:[%s256 + $0x20] sm:%s249]
                %263 = vst [vmem:[%s257 + $0x10] sm:%s249] %v262
                %v264 = vld [vmem:[%s256 + $0x30] sm:%s249]
                %265 = vst [vmem:[%s257 + $0x18] sm:%s249] %v264
              $region83: #{_lambda_.5} parent=77 // loop_footer
                %s255 = sadd.s32 1, %s251
              $region84: #{_lambda_.5} parent=77 // loop_footer_branch
                %250 = sbr.rel target = $region80
              $region85: #{_lambda_.5} parent=77 // loop_exit
                _
            $region78: #{_lambda_.5} parent=69 // pred_fallthru
              _
          $region70: #{_lambda_.5} parent=65 // pred_fallthru
            _
          %286 = vnop
        $region66: #{_lambda_.5} parent=23 // pred_fallthru
          _
      $region24: #{_lambda_.5} parent=5 // pred_fallthru
        _
      %p287 = scmp.le.s32.totalorder 1, %s10
      %p288 = scmp.lt.s32.totalorder %s10, 5
      %p289 = pnand %p287, %p288
      %p290 = pneg %p289
      // Predicated region
      $region101: #{_lambda_.5} parent=5 // pred_check
        _
      $region102: #{_lambda_.5} parent=5 // pred_check_branch
        %292 = sbr.rel (%p289) target = $region104
      $region103: #{_lambda_.5} parent=5 // pred_region
        %s293 = ssub.s32 %s10, 1
        %s294 = sand.u32 %s37, 1
        %s295 = sand.u32 %s37, 1
        %s296 = smul.addr %s295, 32
        %s297 = scalar_lea.vmem [#allocation2], %s296
        // Predicated region
        $region105: #{_lambda_.5} parent=103 // pred_check
          %p298 = pneg %p50
        $region106: #{_lambda_.5} parent=103 // pred_check_branch
          %300 = sbr.rel (%p298) target = $region108
        $region107: #{_lambda_.5} parent=103 // pred_region
          _
        $region108: #{_lambda_.5} parent=103 // pred_fallthru
          _
        %s301 = sand.u32 %s65, 1
        %s302 = sand.u32 %s65, 1
        %s303 = smul.addr %s302, 32
        %s304 = scalar_lea.vmem [#allocation3], %s303
        // Predicated region
        $region109: #{_lambda_.5} parent=103 // pred_check
          %p305 = pneg %p78
        $region110: #{_lambda_.5} parent=103 // pred_check_branch
          %307 = sbr.rel (%p305) target = $region112
        $region111: #{_lambda_.5} parent=103 // pred_region
          _
        $region112: #{_lambda_.5} parent=103 // pred_fallthru
          _
        %s308 = sand.u32 %s37, 1
        %s309 = sand.u32 %s37, 1
        %s310 = smul.addr %s309, 32
        %s311 = scalar_lea.vmem [#allocation2], %s310
        %p312 = pneg %p50
        %p313 = pneg %p47
        %s314 = sand.u32 %s65, 1
        %s315 = sand.u32 %s65, 1
        %s316 = smul.addr %s315, 32
        %s317 = scalar_lea.vmem [#allocation3], %s316
        %p318 = pneg %p78
        %p319 = pneg %p75
        %p320 = pneg %p99
        %p321 = pneg %p96
        %p322 = pneg %p120
        %p323 = pneg %p117
        %p324 = pneg %p148
        %p325 = pneg %p145
        %s326 = sand.u32 %s135, 1
        %s327 = sand.u32 %s135, 1
        %s328 = smul.addr %s327, 32
        %s329 = scalar_lea.vmem [#allocation4], %s328
        %s330 = smul.u32 2, %s20
        %s331 = smul.u32 2, %s20
        %s332 = smul.u32 2, %s20
        %v334 = vld [vmem:[%s297] sm:$0xff]
        %v335 = vld [vmem:[%s297 + $0x8] sm:$0xff]
        %v336 = vld [vmem:[%s297 + $0x10] sm:$0xff]
        %v337 = vld [vmem:[%s297 + $0x18] sm:$0xff]
        %v338 = vld [vmem:[%s2] sm:$0xf]
        %v339 = vld [vmem:[%s2 + $0x4] sm:$0xf]
        %v340 = vld [vmem:[%s2 + $0x8] sm:$0xf]
        %v341 = vld [vmem:[%s2 + $0xc] sm:$0xf]
        %v342 = vld [vmem:[%s3] sm:$0xff]
        %v343 = vld [vmem:[%s3 + $0x8] sm:$0xff]
        %v344 = vld [vmem:[%s3 + $0x10] sm:$0xff]
        %v345 = vld [vmem:[%s3 + $0x18] sm:$0xff]
        %347 = vset.pattern.permute.xlu0 0
        %348 = vperm.xlu0 %347, %v342
        %v349 = vpop.permute.xlu0 %348
        %352 = vset.pattern.permute.xlu0 0
        %353 = vperm.xlu0 %352, %v343
        %v354 = vpop.permute.xlu0 %353
        %357 = vset.pattern.permute.xlu0 0
        %358 = vperm.xlu0 %357, %v344
        %v359 = vpop.permute.xlu0 %358
        %362 = vset.pattern.permute.xlu0 0
        %363 = vperm.xlu0 %362, %v345
        %v364 = vpop.permute.xlu0 %363
        %v370 = vunpack.c.l.b16 %v338
        %v371 = vunpack.c.l.b16 %v339
        %v372 = vunpack.c.l.b16 %v340
        %v373 = vunpack.c.l.b16 %v341
        %v374 = vpack.c.b16 %v371, %v370
        %v375 = vpack.c.b16 %v373, %v372
        %v380 = vunpack.c.l.b16 %v334
        %v381 = vunpack.c.h.b16 %v334
        %v382 = vunpack.c.l.b16 %v335
        %v383 = vunpack.c.h.b16 %v335
        %v384 = vunpack.c.l.b16 %v336
        %v385 = vunpack.c.h.b16 %v336
        %v386 = vunpack.c.l.b16 %v337
        %v387 = vunpack.c.h.b16 %v337
        %v388 = vpack.c.b16 %v382, %v380
        %v389 = vpack.c.b16 %v383, %v381
        %v390 = vpack.c.b16 %v386, %v384
        %v391 = vpack.c.b16 %v387, %v385
        %vm396 = vcmask 261120
        %v398 = vsel %vm396, %v374, 0
        %v401 = vsel %vm396, %v375, 0
        %403 = vmatpush.bf16.msra.mxu0 0
        %404 = vmatpush.bf16.msra.mxu0 0
        %405 = vmatpush.bf16.msra.mxu0 0
        %406 = vmatpush.bf16.msra.mxu0 0
        %407 = vmatpush.bf16.msra.mxu0 0
        %408 = vmatpush.bf16.msra.mxu0 0
        %409 = vmatpush.bf16.msra.mxu0 %v390
        %410 = vmatpush.bf16.msra.mxu0 %v388
        %411 = vmatmul.bf16.gmra.mxu0 %v398
        %v412 = vpop.f32.mrf.mxu0
        %v413 = vadd.f32 %v349, %v412
        %v414 = vpop.f32.mrf.mxu0
        %v415 = vadd.f32 %v354, %v414
        %416 = vmatmul.bf16.gmra.mxu0 %v401
        %v417 = vpop.f32.mrf.mxu0
        %v418 = vadd.f32 %v359, %v417
        %v419 = vpop.f32.mrf.mxu0
        %v420 = vadd.f32 %v364, %v419
        %421 = vdwg.mxu0
        %422 = vmatpush.bf16.msra.mxu0 0
        %423 = vmatpush.bf16.msra.mxu0 0
        %424 = vmatpush.bf16.msra.mxu0 0
        %425 = vmatpush.bf16.msra.mxu0 0
        %426 = vmatpush.bf16.msra.mxu0 0
        %427 = vmatpush.bf16.msra.mxu0 0
        %428 = vmatpush.bf16.msra.mxu0 %v391
        %429 = vmatpush.bf16.msra.mxu0 %v389
        %430 = vmatmul.bf16.gmra.mxu0 %v398
        %v431 = vpop.f32.mrf.mxu0
        %v432 = vadd.f32 %v349, %v431
        %v433 = vpop.f32.mrf.mxu0
        %v434 = vadd.f32 %v354, %v433
        %435 = vmatmul.bf16.gmra.mxu0 %v401
        %v436 = vpop.f32.mrf.mxu0
        %v437 = vadd.f32 %v359, %v436
        %v438 = vpop.f32.mrf.mxu0
        %v439 = vadd.f32 %v364, %v438
        %440 = vdwg.mxu0
        %v441 = vld [vmem:[%s304] sm:$0xff]
        %v442 = vld [vmem:[%s304 + $0x8] sm:$0xff]
        %v443 = vld [vmem:[%s304 + $0x10] sm:$0xff]
        %v444 = vld [vmem:[%s304 + $0x18] sm:$0xff]
        %v445 = vunpack.c.l.bf16 %v441
        %v446 = vunpack.c.h.bf16 %v441
        %v447 = vunpack.c.l.bf16 %v442
        %v448 = vunpack.c.h.bf16 %v442
        %v449 = vunpack.c.l.bf16 %v443
        %v450 = vunpack.c.h.bf16 %v443
        %v451 = vunpack.c.l.bf16 %v444
        %v452 = vunpack.c.h.bf16 %v444
        %v453 = vadd.f32 %v413, %v445
        %v454 = vadd.f32 %v432, %v446
        %v455 = vadd.f32 %v415, %v447
        %v456 = vadd.f32 %v434, %v448
        %v457 = vadd.f32 %v418, %v449
        %v458 = vadd.f32 %v437, %v450
        %v459 = vadd.f32 %v420, %v451
        %v460 = vadd.f32 %v439, %v452
        %v461 = vmul.f32 %v453, 0.5
        %v462 = vmul.f32 %v454, 0.5
        %v463 = vmul.f32 %v455, 0.5
        %v464 = vmul.f32 %v456, 0.5
        %v465 = vmul.f32 %v457, 0.5
        %v466 = vmul.f32 %v458, 0.5
        %v467 = vmul.f32 %v459, 0.5
        %v468 = vmul.f32 %v460, 0.5
        %v469 = vmul.f32 %v453, 0.044715
        %v470 = vmul.f32 %v454, 0.044715
        %v471 = vmul.f32 %v455, 0.044715
        %v472 = vmul.f32 %v456, 0.044715
        %v473 = vmul.f32 %v457, 0.044715
        %v474 = vmul.f32 %v458, 0.044715
        %v475 = vmul.f32 %v459, 0.044715
        %v476 = vmul.f32 %v460, 0.044715
        %v477 = vmul.f32 %v469, %v453
        %v478 = vmul.f32 %v470, %v454
        %v479 = vmul.f32 %v471, %v455
        %v480 = vmul.f32 %v472, %v456
        %v481 = vmul.f32 %v473, %v457
        %v482 = vmul.f32 %v474, %v458
        %v483 = vmul.f32 %v475, %v459
        %v484 = vmul.f32 %v476, %v460
        %v485 = vmul.f32 %v477, %v453
        %v486 = vmul.f32 %v478, %v454
        %v487 = vmul.f32 %v479, %v455
        %v488 = vmul.f32 %v480, %v456
        %v489 = vmul.f32 %v481, %v457
        %v490 = vmul.f32 %v482, %v458
        %v491 = vmul.f32 %v483, %v459
        %v492 = vmul.f32 %v484, %v460
        %v493 = vadd.f32 %v453, %v485
        %v494 = vadd.f32 %v454, %v486
        %v495 = vadd.f32 %v455, %v487
        %v496 = vadd.f32 %v456, %v488
        %v497 = vadd.f32 %v457, %v489
        %v498 = vadd.f32 %v458, %v490
        %v499 = vadd.f32 %v459, %v491
        %v500 = vadd.f32 %v460, %v492
        %v501 = vmul.f32 %v493, 0.7978846
        %v502 = vmul.f32 %v494, 0.7978846
        %v503 = vmul.f32 %v495, 0.7978846
        %v504 = vmul.f32 %v496, 0.7978846
        %v505 = vmul.f32 %v497, 0.7978846
        %v506 = vmul.f32 %v498, 0.7978846
        %v507 = vmul.f32 %v499, 0.7978846
        %v508 = vmul.f32 %v500, 0.7978846
        %v509 = vtanh.pop %v501
        %v510 = vtanh.pop %v502
        %v511 = vtanh.pop %v503
        %v512 = vtanh.pop %v504
        %v513 = vtanh.pop %v505
        %v514 = vtanh.pop %v506
        %v515 = vtanh.pop %v507
        %v516 = vtanh.pop %v508
        %v517 = vadd.f32 %v509, 1.0
        %v518 = vadd.f32 %v510, 1.0
        %v519 = vadd.f32 %v511, 1.0
        %v520 = vadd.f32 %v512, 1.0
        %v521 = vadd.f32 %v513, 1.0
        %v522 = vadd.f32 %v514, 1.0
        %v523 = vadd.f32 %v515, 1.0
        %v524 = vadd.f32 %v516, 1.0
        %v525 = vmul.f32 %v461, %v517
        %v526 = vmul.f32 %v462, %v518
        %v527 = vmul.f32 %v463, %v519
        %v528 = vmul.f32 %v464, %v520
        %v529 = vmul.f32 %v465, %v521
        %v530 = vmul.f32 %v466, %v522
        %v531 = vmul.f32 %v467, %v523
        %v532 = vmul.f32 %v468, %v524
        %v533 = vunpack.c.l.bf16 %v334
        %v534 = vunpack.c.h.bf16 %v334
        %v535 = vunpack.c.l.bf16 %v335
        %v536 = vunpack.c.h.bf16 %v335
        %v537 = vunpack.c.l.bf16 %v336
        %v538 = vunpack.c.h.bf16 %v336
        %v539 = vunpack.c.l.bf16 %v337
        %v540 = vunpack.c.h.bf16 %v337
        %v541 = vadd.f32 %v525, %v533
        %v542 = vadd.f32 %v526, %v534
        %v543 = vadd.f32 %v527, %v535
        %v544 = vadd.f32 %v528, %v536
        %v545 = vadd.f32 %v529, %v537
        %v546 = vadd.f32 %v530, %v538
        %v547 = vadd.f32 %v531, %v539
        %v548 = vadd.f32 %v532, %v540
        %v549 = vpack.c.bf16 %v542, %v541
        %v550 = vpack.c.bf16 %v544, %v543
        %v551 = vpack.c.bf16 %v546, %v545
        %v552 = vpack.c.bf16 %v548, %v547
        %553 = vst [vmem:[%s329] sm:$0xff] %v549
        %554 = vst [vmem:[%s329 + $0x8] sm:$0xff] %v550
        %555 = vst [vmem:[%s329 + $0x10] sm:$0xff] %v551
        %556 = vst [vmem:[%s329 + $0x18] sm:$0xff] %v552
        %s557 = sand.u32 %s135, 1
        %s558 = sand.u32 %s135, 1
        %s559 = smul.addr %s558, 32
        %s560 = scalar_lea.vmem [#allocation4], %s559
        // Predicated region
        $region113: #{_lambda_.5} parent=103 // pred_check
          %p561 = pneg %p145
        $region114: #{_lambda_.5} parent=103 // pred_check_branch
          %563 = sbr.rel (%p561) target = $region116
        $region115: #{_lambda_.5} parent=103 // pred_region
          %s564 = smul.u32 2, %s20
          %s565 = smul.addr %s19, 16
          %s566 = sadd.s32 %s564, %s565
          %s567 = smul.addr %s566, 4
          %s568 = scalar_lea.vmem %s4, %s567
          // Predicated region
          $region117: #{_lambda_.5} parent=115 // pred_check
            _
          $region118: #{_lambda_.5} parent=115 // pred_check_branch
            %570 = sbr.rel (0) target = $region120
          $region119: #{_lambda_.5} parent=115 // pred_region
            // Predicated region
            $region121: #{_lambda_.5} parent=119 // pred_check
              _
            $region122: #{_lambda_.5} parent=119 // pred_check_branch
              %572 = sbr.rel (0) target = $region124
            $region123: #{_lambda_.5} parent=119 // pred_region
              // Predicated region
              $region136: #{_lambda_.5} parent=123 // pred_check
                _
              $region137: #{_lambda_.5} parent=123 // pred_check_branch
                %594 = sbr.rel (0) target = $region139
              $region138: #{_lambda_.5} parent=123 // pred_region
                loop: start=0, step=1, limit=1
                $region140: #{_lambda_.5} parent=138 // loop_pre_header
                  _
                $region141: #{_lambda_.5} parent=138 // loop_header
                  %s596 = sphi 0, %s600
                  %p597 = scmp.ge.s32.totalorder %s596, 1
                  %s601 = sphi %s560, %s560
                  %s602 = sphi %s568, %s568
                $region142: #{_lambda_.5} parent=138 // loop_header_branch
                  %599 = sbr.rel (%p597) target = $region146
                $region143: #{_lambda_.5} parent=138 // loop_body
                  %v603 = vld [vmem:[%s601] sm:$0xff]
                  %604 = vst [vmem:[%s602] sm:$0xff] %v603
                  %v605 = vld [vmem:[%s601 + $0x8] sm:$0xff]
                  %606 = vst [vmem:[%s602 + $0x10] sm:$0xff] %v605
                  %v607 = vld [vmem:[%s601 + $0x10] sm:$0xff]
                  %608 = vst [vmem:[%s602 + $0x20] sm:$0xff] %v607
                  %v609 = vld [vmem:[%s601 + $0x18] sm:$0xff]
                  %610 = vst [vmem:[%s602 + $0x30] sm:$0xff] %v609
                $region144: #{_lambda_.5} parent=138 // loop_footer
                  %s600 = sadd.s32 1, %s596
                $region145: #{_lambda_.5} parent=138 // loop_footer_branch
                  %595 = sbr.rel target = $region141
                $region146: #{_lambda_.5} parent=138 // loop_exit
                  _
              $region139: #{_lambda_.5} parent=123 // pred_fallthru
                _
              // Predicated region
              $region147: #{_lambda_.5} parent=123 // pred_check
                _
              $region148: #{_lambda_.5} parent=123 // pred_check_branch
                %612 = sbr.rel target = $region150
              $region149: #{_lambda_.5} parent=123 // pred_region
                _
              $region150: #{_lambda_.5} parent=123 // pred_fallthru
                _
            $region124: #{_lambda_.5} parent=119 // pred_fallthru
              _
            // Predicated region
            $region125: #{_lambda_.5} parent=119 // pred_check
              _
            $region126: #{_lambda_.5} parent=119 // pred_check_branch
              %574 = sbr.rel target = $region128
            $region127: #{_lambda_.5} parent=119 // pred_region
              %s576 = ssub.s32 256, 1
              loop: start=0, step=1, limit=1
              $region129: #{_lambda_.5} parent=127 // loop_pre_header
                _
              $region130: #{_lambda_.5} parent=127 // loop_header
                %s578 = sphi 0, %s582
                %p579 = scmp.ge.s32.totalorder %s578, 1
                %s583 = sphi %s560, %s560
                %s584 = sphi %s568, %s568
              $region131: #{_lambda_.5} parent=127 // loop_header_branch
                %581 = sbr.rel (%p579) target = $region135
              $region132: #{_lambda_.5} parent=127 // loop_body
                %v585 = vld [vmem:[%s583] sm:%s576]
                %586 = vst [vmem:[%s584] sm:%s576] %v585
                %v587 = vld [vmem:[%s583 + $0x8] sm:%s576]
                %588 = vst [vmem:[%s584 + $0x10] sm:%s576] %v587
                %v589 = vld [vmem:[%s583 + $0x10] sm:%s576]
                %590 = vst [vmem:[%s584 + $0x20] sm:%s576] %v589
                %v591 = vld [vmem:[%s583 + $0x18] sm:%s576]
                %592 = vst [vmem:[%s584 + $0x30] sm:%s576] %v591
              $region133: #{_lambda_.5} parent=127 // loop_footer
                %s582 = sadd.s32 1, %s578
              $region134: #{_lambda_.5} parent=127 // loop_footer_branch
                %577 = sbr.rel target = $region130
              $region135: #{_lambda_.5} parent=127 // loop_exit
                _
            $region128: #{_lambda_.5} parent=119 // pred_fallthru
              _
          $region120: #{_lambda_.5} parent=115 // pred_fallthru
            _
          %613 = vnop
        $region116: #{_lambda_.5} parent=103 // pred_fallthru
          _
      $region104: #{_lambda_.5} parent=5 // pred_fallthru
        _
      %p614 = scmp.le.s32.totalorder 2, %s10
      // Predicated region
      $region151: #{_lambda_.5} parent=5 // pred_check
        %p615 = pneg %p614
      $region152: #{_lambda_.5} parent=5 // pred_check_branch
        %617 = sbr.rel (%p615) target = $region154
      $region153: #{_lambda_.5} parent=5 // pred_region
        %s618 = ssub.s32 %s10, 2
        // Predicated region
        $region155: #{_lambda_.5} parent=153 // pred_check
          %p619 = pneg %p151
        $region156: #{_lambda_.5} parent=153 // pred_check_branch
          %621 = sbr.rel (%p619) target = $region158
        $region157: #{_lambda_.5} parent=153 // pred_region
          %s622 = sand.u32 %s136, 1
          %s623 = sand.u32 %s136, 1
          %s624 = smul.addr %s623, 32
          %s625 = scalar_lea.vmem [#allocation4], %s624
        $region158: #{_lambda_.5} parent=153 // pred_fallthru
          _
      $region154: #{_lambda_.5} parent=5 // pred_fallthru
        _
    $region6: #{_lambda_.5} parent=1 // loop_footer
      %s14 = sadd.s32 1, %s10
    $region7: #{_lambda_.5} parent=1 // loop_footer_branch
      %9 = sbr.rel target = $region3
    $region8: #{_lambda_.5} parent=1 // loop_exit
      _

// kernel: _lambda_.7
$region0: #{_lambda_.7}
  #allocation0 [shape = 'u32[]', space=smem, size = 0x4, offset = 0x4, fixed_abs, tag = 'smem constant byte address 0x4 - core index']
  #allocation1 [shape = 'u32[72,128]{1,0:T(1,128)}', space=vmem, size = 0x9000, scoped, tag = 'internal scratch']
  %s0 = inlined_call_operand.vmem [shape: bf16[2,32,512], index: 0, kind: input, shape index: {}]
  %s1 = inlined_call_operand.vmem [shape: bf16[32,32], index: 1, kind: input, shape index: {}]
  %s2 = inlined_call_operand.vmem [shape: f32[32,1], index: 2, kind: input, shape index: {}]
  %s3 = inlined_call_operand.vmem [shape: bf16[32,32], index: 3, kind: input, shape index: {}]
  %s4 = inlined_call_operand.vmem [shape: f32[32,1], index: 4, kind: input, shape index: {}]
  %s5 = inlined_call_operand.vmem [shape: bf16[64,32], index: 5, kind: input, shape index: {}]
  %s6 = inlined_call_operand.vmem [shape: f32[64,1], index: 6, kind: input, shape index: {}]
  %s7 = inlined_call_operand.vmem [shape: bf16[3,64], index: 7, kind: input, shape index: {}]
  %s8 = inlined_call_operand.vmem [shape: f32[3,1], index: 8, kind: input, shape index: {}]
  %s9 = inlined_call_operand.vmem [shape: f32[2,3,512], index: 9, kind: output, shape index: {}]
  %s10 = sld [smem:[#allocation0]]
  $region107: #{_lambda_.7} parent=0
    _
  %s12 = ssub.s32 1, %s10
  %s13 = scalar_select 0, %s12, %s10
  $region1: #{_lambda_.7} parent=0
    #allocation2 [shape = 'u8[32768]{0}', space=vmem, size = 0x8000, scoped, tag = 'input window, operand 0']
    loop: start=0, step=1, limit=6
    $region2: #{_lambda_.7} parent=1 // loop_pre_header
      _
    $region3: #{_lambda_.7} parent=1 // loop_header
      %s15 = sphi 0, %s19
      %p16 = scmp.ge.s32.totalorder %s15, 6
      %s22 = sphi 0, %s34
      %s23 = sphi 0, %s30
      %s24 = sphi 0, %s22
      %s25 = sphi 0, %s23
      %s26 = sphi 0, %s24
      %s27 = sphi 0, %s25
      %s39 = sphi 0, %s41
      %s42 = sphi 0, %s39
      %s43 = sphi 0, %s42
      %s59 = sphi 0, %s43
      %s63 = sphi 0, %s63
      %s65 = sphi 0, %s63
      %s66 = sphi 0, %s65
      %s80 = sphi 0, %s66
      %s84 = sphi 0, %s84
      %s86 = sphi 0, %s84
      %s87 = sphi 0, %s86
      %s101 = sphi 0, %s87
      %s105 = sphi 0, %s105
      %s107 = sphi 0, %s105
      %s108 = sphi 0, %s107
      %s122 = sphi 0, %s108
      %s126 = sphi 0, %s126
      %s128 = sphi 0, %s126
      %s129 = sphi 0, %s128
      %s143 = sphi 0, %s129
      %s147 = sphi 0, %s147
      %s149 = sphi 0, %s147
      %s150 = sphi 0, %s149
      %s164 = sphi 0, %s150
      %s168 = sphi 0, %s168
      %s170 = sphi 0, %s168
      %s171 = sphi 0, %s170
      %s185 = sphi 0, %s171
      %s189 = sphi 0, %s189
      %s191 = sphi 0, %s189
      %s192 = sphi 0, %s191
      %s206 = sphi 0, %s192
      %s210 = sphi 0, %s210
      %s212 = sphi 0, %s210
      %s213 = sphi 0, %s212
      %s227 = sphi 0, %s213
      %s235 = sphi 0, %s237
      %s238 = sphi 0, %s235
      %s239 = sphi 0, %s238
      %s255 = sphi 0, %s239
    $region4: #{_lambda_.7} parent=1 // loop_header_branch
      %18 = sbr.rel (%p16) target = $region8
    $region5: #{_lambda_.7} parent=1 // loop_body
      %s20 = ssub.s32 %s15, 1
      %s21 = ssub.s32 %s15, 2
      %s28 = sadd.s32 1, %s23
      %p29 = scmp.ge.s32.totalorder %s28, 2
      %s30 = scalar_select %p29, 0, %s28
      %s31 = sadd.s32 1, %s22
      %s32 = scalar_select %p29, %s31, %s22
      %p33 = scmp.ge.s32.totalorder %s32, 2
      %s34 = scalar_select %p33, 0, %s32
      %s35 = ssub.s32 %s22, %s34
      %s36 = ssub.s32 %s23, %s30
      %s37 = sor.u32 %s35, %s36
      %p38 = scmp.eq.s32.totalorder %s37, 0
      %s40 = sadd.s32 %s39, 1
      %s41 = scalar_select %p38, %s39, %s40
      %p44 = pneg %p38
      %p45 = scmp.eq.s32.totalorder %s15, 3
      %p46 = por %p44, %p45
      %p47 = scmp.ne.s32.totalorder %s39, %s42
      %p48 = scmp.eq.s32.totalorder %s15, 0
      %p49 = por %p47, %p48
      %p50 = scmp.ne.s32.totalorder %s39, %s42
      %p51 = scmp.eq.s32.totalorder %s20, 3
      %p52 = por %p50, %p51
      %p53 = scmp.ne.s32.totalorder %s42, %s43
      %p54 = scmp.eq.s32.totalorder %s20, 0
      %p55 = por %p53, %p54
      %p56 = scmp.ne.s32.totalorder %s42, %s43
      %p57 = scmp.eq.s32.totalorder %s21, 3
      %p58 = por %p56, %p57
      %p60 = scmp.ne.s32.totalorder %s43, %s59
      %p61 = scmp.eq.s32.totalorder %s21, 0
      %p62 = por %p60, %p61
      %s64 = sadd.s32 %s63, 1
      %p67 = scmp.eq.s32.totalorder %s15, 3
      %p68 = scmp.ne.s32.totalorder %s63, %s65
      %p69 = scmp.eq.s32.totalorder %s15, 0
      %p70 = por %p68, %p69
      %p71 = scmp.ne.s32.totalorder %s63, %s65
      %p72 = scmp.eq.s32.totalorder %s20, 3
      %p73 = por %p71, %p72
      %p74 = scmp.ne.s32.totalorder %s65, %s66
      %p75 = scmp.eq.s32.totalorder %s20, 0
      %p76 = por %p74, %p75
      %p77 = scmp.ne.s32.totalorder %s65, %s66
      %p78 = scmp.eq.s32.totalorder %s21, 3
      %p79 = por %p77, %p78
      %p81 = scmp.ne.s32.totalorder %s66, %s80
      %p82 = scmp.eq.s32.totalorder %s21, 0
      %p83 = por %p81, %p82
      %s85 = sadd.s32 %s84, 1
      %p88 = scmp.eq.s32.totalorder %s15, 3
      %p89 = scmp.ne.s32.totalorder %s84, %s86
      %p90 = scmp.eq.s32.totalorder %s15, 0
      %p91 = por %p89, %p90
      %p92 = scmp.ne.s32.totalorder %s84, %s86
      %p93 = scmp.eq.s32.totalorder %s20, 3
      %p94 = por %p92, %p93
      %p95 = scmp.ne.s32.totalorder %s86, %s87
      %p96 = scmp.eq.s32.totalorder %s20, 0
      %p97 = por %p95, %p96
      %p98 = scmp.ne.s32.totalorder %s86, %s87
      %p99 = scmp.eq.s32.totalorder %s21, 3
      %p100 = por %p98, %p99
      %p102 = scmp.ne.s32.totalorder %s87, %s101
      %p103 = scmp.eq.s32.totalorder %s21, 0
      %p104 = por %p102, %p103
      %s106 = sadd.s32 %s105, 1
      %p109 = scmp.eq.s32.totalorder %s15, 3
      %p110 = scmp.ne.s32.totalorder %s105, %s107
      %p111 = scmp.eq.s32.totalorder %s15, 0
      %p112 = por %p110, %p111
      %p113 = scmp.ne.s32.totalorder %s105, %s107
      %p114 = scmp.eq.s32.totalorder %s20, 3
      %p115 = por %p113, %p114
      %p116 = scmp.ne.s32.totalorder %s107, %s108
      %p117 = scmp.eq.s32.totalorder %s20, 0
      %p118 = por %p116, %p117
      %p119 = scmp.ne.s32.totalorder %s107, %s108
      %p120 = scmp.eq.s32.totalorder %s21, 3
      %p121 = por %p119, %p120
      %p123 = scmp.ne.s32.totalorder %s108, %s122
      %p124 = scmp.eq.s32.totalorder %s21, 0
      %p125 = por %p123, %p124
      %s127 = sadd.s32 %s126, 1
      %p130 = scmp.eq.s32.totalorder %s15, 3
      %p131 = scmp.ne.s32.totalorder %s126, %s128
      %p132 = scmp.eq.s32.totalorder %s15, 0
      %p133 = por %p131, %p132
      %p134 = scmp.ne.s32.totalorder %s126, %s128
      %p135 = scmp.eq.s32.totalorder %s20, 3
      %p136 = por %p134, %p135
      %p137 = scmp.ne.s32.totalorder %s128, %s129
      %p138 = scmp.eq.s32.totalorder %s20, 0
      %p139 = por %p137, %p138
      %p140 = scmp.ne.s32.totalorder %s128, %s129
      %p141 = scmp.eq.s32.totalorder %s21, 3
      %p142 = por %p140, %p141
      %p144 = scmp.ne.s32.totalorder %s129, %s143
      %p145 = scmp.eq.s32.totalorder %s21, 0
      %p146 = por %p144, %p145
      %s148 = sadd.s32 %s147, 1
      %p151 = scmp.eq.s32.totalorder %s15, 3
      %p152 = scmp.ne.s32.totalorder %s147, %s149
      %p153 = scmp.eq.s32.totalorder %s15, 0
      %p154 = por %p152, %p153
      %p155 = scmp.ne.s32.totalorder %s147, %s149
      %p156 = scmp.eq.s32.totalorder %s20, 3
      %p157 = por %p155, %p156
      %p158 = scmp.ne.s32.totalorder %s149, %s150
      %p159 = scmp.eq.s32.totalorder %s20, 0
      %p160 = por %p158, %p159
      %p161 = scmp.ne.s32.totalorder %s149, %s150
      %p162 = scmp.eq.s32.totalorder %s21, 3
      %p163 = por %p161, %p162
      %p165 = scmp.ne.s32.totalorder %s150, %s164
      %p166 = scmp.eq.s32.totalorder %s21, 0
      %p167 = por %p165, %p166
      %s169 = sadd.s32 %s168, 1
      %p172 = scmp.eq.s32.totalorder %s15, 3
      %p173 = scmp.ne.s32.totalorder %s168, %s170
      %p174 = scmp.eq.s32.totalorder %s15, 0
      %p175 = por %p173, %p174
      %p176 = scmp.ne.s32.totalorder %s168, %s170
      %p177 = scmp.eq.s32.totalorder %s20, 3
      %p178 = por %p176, %p177
      %p179 = scmp.ne.s32.totalorder %s170, %s171
      %p180 = scmp.eq.s32.totalorder %s20, 0
      %p181 = por %p179, %p180
      %p182 = scmp.ne.s32.totalorder %s170, %s171
      %p183 = scmp.eq.s32.totalorder %s21, 3
      %p184 = por %p182, %p183
      %p186 = scmp.ne.s32.totalorder %s171, %s185
      %p187 = scmp.eq.s32.totalorder %s21, 0
      %p188 = por %p186, %p187
      %s190 = sadd.s32 %s189, 1
      %p193 = scmp.eq.s32.totalorder %s15, 3
      %p194 = scmp.ne.s32.totalorder %s189, %s191
      %p195 = scmp.eq.s32.totalorder %s15, 0
      %p196 = por %p194, %p195
      %p197 = scmp.ne.s32.totalorder %s189, %s191
      %p198 = scmp.eq.s32.totalorder %s20, 3
      %p199 = por %p197, %p198
      %p200 = scmp.ne.s32.totalorder %s191, %s192
      %p201 = scmp.eq.s32.totalorder %s20, 0
      %p202 = por %p200, %p201
      %p203 = scmp.ne.s32.totalorder %s191, %s192
      %p204 = scmp.eq.s32.totalorder %s21, 3
      %p205 = por %p203, %p204
      %p207 = scmp.ne.s32.totalorder %s192, %s206
      %p208 = scmp.eq.s32.totalorder %s21, 0
      %p209 = por %p207, %p208
      %s211 = sadd.s32 %s210, 1
      %p214 = scmp.eq.s32.totalorder %s15, 3
      %p215 = scmp.ne.s32.totalorder %s210, %s212
      %p216 = scmp.eq.s32.totalorder %s15, 0
      %p217 = por %p215, %p216
      %p218 = scmp.ne.s32.totalorder %s210, %s212
      %p219 = scmp.eq.s32.totalorder %s20, 3
      %p220 = por %p218, %p219
      %p221 = scmp.ne.s32.totalorder %s212, %s213
      %p222 = scmp.eq.s32.totalorder %s20, 0
      %p223 = por %p221, %p222
      %p224 = scmp.ne.s32.totalorder %s212, %s213
      %p225 = scmp.eq.s32.totalorder %s21, 3
      %p226 = por %p224, %p225
      %p228 = scmp.ne.s32.totalorder %s213, %s227
      %p229 = scmp.eq.s32.totalorder %s21, 0
      %p230 = por %p228, %p229
      %s231 = ssub.s32 %s22, %s34
      %s232 = ssub.s32 %s23, %s30
      %s233 = sor.u32 %s231, %s232
      %p234 = scmp.eq.s32.totalorder %s233, 0
      %s236 = sadd.s32 %s235, 1
      %s237 = scalar_select %p234, %s235, %s236
      %p240 = pneg %p234
      %p241 = scmp.eq.s32.totalorder %s15, 3
      %p242 = por %p240, %p241
      %p243 = scmp.ne.s32.totalorder %s235, %s238
      %p244 = scmp.eq.s32.totalorder %s15, 0
      %p245 = por %p243, %p244
      %p246 = scmp.ne.s32.totalorder %s235, %s238
      %p247 = scmp.eq.s32.totalorder %s20, 3
      %p248 = por %p246, %p247
      %p249 = scmp.ne.s32.totalorder %s238, %s239
      %p250 = scmp.eq.s32.totalorder %s20, 0
      %p251 = por %p249, %p250
      %p252 = scmp.ne.s32.totalorder %s238, %s239
      %p253 = scmp.eq.s32.totalorder %s21, 3
      %p254 = por %p252, %p253
      %p256 = scmp.ne.s32.totalorder %s239, %s255
      %p257 = scmp.eq.s32.totalorder %s21, 0
      %p258 = por %p256, %p257
      %p259 = scmp.le.s32.totalorder 1, %s15
      %p260 = scmp.lt.s32.totalorder %s15, 5
      %p261 = pnand %p259, %p260
      %p262 = pneg %p261
      // Predicated region
      $region9: #{_lambda_.7} parent=5 // pred_check
        _
      $region10: #{_lambda_.7} parent=5 // pred_check_branch
        %264 = sbr.rel (%p261) target = $region12
      $region11: #{_lambda_.7} parent=5 // pred_region
        %s265 = ssub.s32 %s15, 1
        // Predicated region
        $region13: #{_lambda_.7} parent=11 // pred_check
          %p266 = pneg %p76
        $region14: #{_lambda_.7} parent=11 // pred_check_branch
          %268 = sbr.rel (%p266) target = $region16
        $region15: #{_lambda_.7} parent=11 // pred_region
          _
        $region16: #{_lambda_.7} parent=11 // pred_fallthru
          _
        // Predicated region
        $region17: #{_lambda_.7} parent=11 // pred_check
          %p269 = pneg %p97
        $region18: #{_lambda_.7} parent=11 // pred_check_branch
          %271 = sbr.rel (%p269) target = $region20
        $region19: #{_lambda_.7} parent=11 // pred_region
          _
        $region20: #{_lambda_.7} parent=11 // pred_fallthru
          _
        // Predicated region
        $region21: #{_lambda_.7} parent=11 // pred_check
          %p272 = pneg %p118
        $region22: #{_lambda_.7} parent=11 // pred_check_branch
          %274 = sbr.rel (%p272) target = $region24
        $region23: #{_lambda_.7} parent=11 // pred_region
          _
        $region24: #{_lambda_.7} parent=11 // pred_fallthru
          _
        // Predicated region
        $region25: #{_lambda_.7} parent=11 // pred_check
          %p275 = pneg %p139
        $region26: #{_lambda_.7} parent=11 // pred_check_branch
          %277 = sbr.rel (%p275) target = $region28
        $region27: #{_lambda_.7} parent=11 // pred_region
          _
        $region28: #{_lambda_.7} parent=11 // pred_fallthru
          _
        // Predicated region
        $region29: #{_lambda_.7} parent=11 // pred_check
          %p278 = pneg %p160
        $region30: #{_lambda_.7} parent=11 // pred_check_branch
          %280 = sbr.rel (%p278) target = $region32
        $region31: #{_lambda_.7} parent=11 // pred_region
          _
        $region32: #{_lambda_.7} parent=11 // pred_fallthru
          _
        // Predicated region
        $region33: #{_lambda_.7} parent=11 // pred_check
          %p281 = pneg %p181
        $region34: #{_lambda_.7} parent=11 // pred_check_branch
          %283 = sbr.rel (%p281) target = $region36
        $region35: #{_lambda_.7} parent=11 // pred_region
          _
        $region36: #{_lambda_.7} parent=11 // pred_fallthru
          _
        // Predicated region
        $region37: #{_lambda_.7} parent=11 // pred_check
          %p284 = pneg %p202
        $region38: #{_lambda_.7} parent=11 // pred_check_branch
          %286 = sbr.rel (%p284) target = $region40
        $region39: #{_lambda_.7} parent=11 // pred_region
          _
        $region40: #{_lambda_.7} parent=11 // pred_fallthru
          _
        // Predicated region
        $region41: #{_lambda_.7} parent=11 // pred_check
          %p287 = pneg %p223
        $region42: #{_lambda_.7} parent=11 // pred_check_branch
          %289 = sbr.rel (%p287) target = $region44
        $region43: #{_lambda_.7} parent=11 // pred_region
          _
        $region44: #{_lambda_.7} parent=11 // pred_fallthru
          _
      $region12: #{_lambda_.7} parent=5 // pred_fallthru
        _
      %p290 = scmp.lt.s32.totalorder %s15, 4
      // Predicated region
      $region45: #{_lambda_.7} parent=5 // pred_check
        %p291 = pneg %p290
      $region46: #{_lambda_.7} parent=5 // pred_check_branch
        %293 = sbr.rel (%p291) target = $region48
      $region47: #{_lambda_.7} parent=5 // pred_region
        // Predicated region
        $region49: #{_lambda_.7} parent=47 // pred_check
          %p294 = pneg %p49
        $region50: #{_lambda_.7} parent=47 // pred_check_branch
          %296 = sbr.rel (%p294) target = $region52
        $region51: #{_lambda_.7} parent=47 // pred_region
          %s297 = sand.u32 %s39, 1
          %s298 = sand.u32 %s39, 1
          %s299 = smul.addr %s298, 32
          %s300 = scalar_lea.vmem [#allocation2], %s299
          %s301 = smul.u32 2, %s23
          %s302 = smul.addr %s22, 16
          %s303 = sadd.s32 %s301, %s302
          %s304 = smul.addr %s303, 4
          %s305 = scalar_lea.vmem %s0, %s304
          // Predicated region
          $region53: #{_lambda_.7} parent=51 // pred_check
            _
          $region54: #{_lambda_.7} parent=51 // pred_check_branch
            %307 = sbr.rel (0) target = $region56
          $region55: #{_lambda_.7} parent=51 // pred_region
            // Predicated region
            $region57: #{_lambda_.7} parent=55 // pred_check
              _
            $region58: #{_lambda_.7} parent=55 // pred_check_branch
              %309 = sbr.rel (0) target = $region60
            $region59: #{_lambda_.7} parent=55 // pred_region
              // Predicated region
              $region72: #{_lambda_.7} parent=59 // pred_check
                _
              $region73: #{_lambda_.7} parent=59 // pred_check_branch
                %331 = sbr.rel (0) target = $region75
              $region74: #{_lambda_.7} parent=59 // pred_region
                loop: start=0, step=1, limit=1
                $region76: #{_lambda_.7} parent=74 // loop_pre_header
                  _
                $region77: #{_lambda_.7} parent=74 // loop_header
                  %s333 = sphi 0, %s337
                  %p334 = scmp.ge.s32.totalorder %s333, 1
                  %s338 = sphi %s305, %s305
                  %s339 = sphi %s300, %s300
                $region78: #{_lambda_.7} parent=74 // loop_header_branch
                  %336 = sbr.rel (%p334) target = $region82
                $region79: #{_lambda_.7} parent=74 // loop_body
                  %v340 = vld [vmem:[%s338] sm:$0xff]
                  %341 = vst [vmem:[%s339] sm:$0xff] %v340
                  %v342 = vld [vmem:[%s338 + $0x10] sm:$0xff]
                  %343 = vst [vmem:[%s339 + $0x8] sm:$0xff] %v342
                  %v344 = vld [vmem:[%s338 + $0x20] sm:$0xff]
                  %345 = vst [vmem:[%s339 + $0x10] sm:$0xff] %v344
                  %v346 = vld [vmem:[%s338 + $0x30] sm:$0xff]
                  %347 = vst [vmem:[%s339 + $0x18] sm:$0xff] %v346
                $region80: #{_lambda_.7} parent=74 // loop_footer
                  %s337 = sadd.s32 1, %s333
                $region81: #{_lambda_.7} parent=74 // loop_footer_branch
                  %332 = sbr.rel target = $region77
                $region82: #{_lambda_.7} parent=74 // loop_exit
                  _
              $region75: #{_lambda_.7} parent=59 // pred_fallthru
                _
              // Predicated region
              $region83: #{_lambda_.7} parent=59 // pred_check
                _
              $region84: #{_lambda_.7} parent=59 // pred_check_branch
                %349 = sbr.rel target = $region86
              $region85: #{_lambda_.7} parent=59 // pred_region
                _
              $region86: #{_lambda_.7} parent=59 // pred_fallthru
                _
            $region60: #{_lambda_.7} parent=55 // pred_fallthru
              _
            // Predicated region
            $region61: #{_lambda_.7} parent=55 // pred_check
              _
            $region62: #{_lambda_.7} parent=55 // pred_check_branch
              %311 = sbr.rel target = $region64
            $region63: #{_lambda_.7} parent=55 // pred_region
              %s313 = ssub.s32 256, 1
              loop: start=0, step=1, limit=1
              $region65: #{_lambda_.7} parent=63 // loop_pre_header
                _
              $region66: #{_lambda_.7} parent=63 // loop_header
                %s315 = sphi 0, %s319
                %p316 = scmp.ge.s32.totalorder %s315, 1
                %s320 = sphi %s305, %s305
                %s321 = sphi %s300, %s300
              $region67: #{_lambda_.7} parent=63 // loop_header_branch
                %318 = sbr.rel (%p316) target = $region71
              $region68: #{_lambda_.7} parent=63 // loop_body
                %v322 = vld [vmem:[%s320] sm:%s313]
                %323 = vst [vmem:[%s321] sm:%s313] %v322
                %v324 = vld [vmem:[%s320 + $0x10] sm:%s313]
                %325 = vst [vmem:[%s321 + $0x8] sm:%s313] %v324
                %v326 = vld [vmem:[%s320 + $0x20] sm:%s313]
                %327 = vst [vmem:[%s321 + $0x10] sm:%s313] %v326
                %v328 = vld [vmem:[%s320 + $0x30] sm:%s313]
                %329 = vst [vmem:[%s321 + $0x18] sm:%s313] %v328
              $region69: #{_lambda_.7} parent=63 // loop_footer
                %s319 = sadd.s32 1, %s315
              $region70: #{_lambda_.7} parent=63 // loop_footer_branch
                %314 = sbr.rel target = $region66
              $region71: #{_lambda_.7} parent=63 // loop_exit
                _
            $region64: #{_lambda_.7} parent=55 // pred_fallthru
              _
          $region56: #{_lambda_.7} parent=51 // pred_fallthru
            _
          %350 = vnop
        $region52: #{_lambda_.7} parent=47 // pred_fallthru
          _
      $region48: #{_lambda_.7} parent=5 // pred_fallthru
        _
      %p351 = scmp.le.s32.totalorder 1, %s15
      %p352 = scmp.lt.s32.totalorder %s15, 5
      %p353 = pnand %p351, %p352
      %p354 = pneg %p353
      // Predicated region
      $region87: #{_lambda_.7} parent=5 // pred_check
        _
      $region88: #{_lambda_.7} parent=5 // pred_check_branch
        %356 = sbr.rel (%p353) target = $region90
      $region89: #{_lambda_.7} parent=5 // pred_region
        %s357 = ssub.s32 %s15, 1
        %s358 = sand.u32 %s42, 1
        %s359 = sand.u32 %s42, 1
        %s360 = smul.addr %s359, 32
        %s361 = scalar_lea.vmem [#allocation2], %s360
        // Predicated region
        $region91: #{_lambda_.7} parent=89 // pred_check
          %p362 = pneg %p55
        $region92: #{_lambda_.7} parent=89 // pred_check_branch
          %364 = sbr.rel (%p362) target = $region94
        $region93: #{_lambda_.7} parent=89 // pred_region
          _
        $region94: #{_lambda_.7} parent=89 // pred_fallthru
          _
        %s365 = sand.u32 %s42, 1
        %s366 = sand.u32 %s42, 1
        %s367 = smul.addr %s366, 32
        %s368 = scalar_lea.vmem [#allocation2], %s367
        %p369 = pneg %p55
        %p370 = pneg %p52
        %p371 = pneg %p76
        %p372 = pneg %p73
        %p373 = pneg %p97
        %p374 = pneg %p94
        %p375 = pneg %p118
        %p376 = pneg %p115
        %p377 = pneg %p139
        %p378 = pneg %p136
        %p379 = pneg %p160
        %p380 = pneg %p157
        %p381 = pneg %p181
        %p382 = pneg %p178
        %p383 = pneg %p202
        %p384 = pneg %p199
        %p385 = pneg %p223
        %p386 = pneg %p220
        %p387 = pneg %p251
        %p388 = pneg %p248
        %s389 = smul.u32 2, %s25
        %p390 = scmp.lt.s32.totalorder %s24, 1
        %s391 = scalar_select %p390, %s24, 1
        %p392 = scmp.lt.s32.totalorder %s389, 3
        %s393 = scalar_select %p392, %s389, 3
        %s394 = smul.addr %s391, 4
        %s395 = sadd.s32 %s393, %s394
        %s396 = smul.addr %s395, 4
        %s397 = scalar_lea.vmem %s9, %s396
        %s398 = smul.u32 2, %s25
        %s399 = smul.u32 2, %s25
        %p400 = scmp.lt.s32.totalorder %s24, 1
        %s401 = scalar_select %p400, %s24, 1
        %p402 = scmp.lt.s32.totalorder %s399, 3
        %s403 = scalar_select %p402, %s399, 3
        %s404 = smul.addr %s401, 4
        %s405 = sadd.s32 %s403, %s404
        %s406 = smul.addr %s405, 4
        %s407 = scalar_lea.vmem %s9, %s406
        %s408 = smul.u32 2, %s25
        %v410 = vld [vmem:[%s361] sm:$0xff]
        %v411 = vld [vmem:[%s361 + $0x8] sm:$0xff]
        %v412 = vld [vmem:[%s361 + $0x10] sm:$0xff]
        %v413 = vld [vmem:[%s361 + $0x18] sm:$0xff]
        %v414 = vunpack.c.l.bf16 %v410
        %v415 = vunpack.c.h.bf16 %v410
        %v416 = vunpack.c.l.bf16 %v411
        %v417 = vunpack.c.h.bf16 %v411
        %v418 = vunpack.c.l.bf16 %v412
        %v419 = vunpack.c.h.bf16 %v412
        %v420 = vunpack.c.l.bf16 %v413
        %v421 = vunpack.c.h.bf16 %v413
        %v422 = vld [vmem:[%s1] sm:$0xf]
        %v423 = vld [vmem:[%s1 + $0x4] sm:$0xf]
        %v424 = vld [vmem:[%s1 + $0x8] sm:$0xf]
        %v425 = vld [vmem:[%s1 + $0xc] sm:$0xf]
        %v426 = vld [vmem:[%s2] sm:$0xff]
        %v427 = vld [vmem:[%s2 + $0x8] sm:$0xff]
        %v428 = vld [vmem:[%s2 + $0x10] sm:$0xff]
        %v429 = vld [vmem:[%s2 + $0x18] sm:$0xff]
        %431 = vset.pattern.permute.xlu0 0
        %432 = vperm.xlu0 %431, %v426
        %v433 = vpop.permute.xlu0 %432
        %436 = vset.pattern.permute.xlu0 0
        %437 = vperm.xlu0 %436, %v427
        %v438 = vpop.permute.xlu0 %437
        %441 = vset.pattern.permute.xlu0 0
        %442 = vperm.xlu0 %441, %v428
        %v443 = vpop.permute.xlu0 %442
        %446 = vset.pattern.permute.xlu0 0
        %447 = vperm.xlu0 %446, %v429
        %v448 = vpop.permute.xlu0 %447
        %v454 = vunpack.c.l.b16 %v422
        %v455 = vunpack.c.l.b16 %v423
        %v456 = vunpack.c.l.b16 %v424
        %v457 = vunpack.c.l.b16 %v425
        %v458 = vpack.c.b16 %v455, %v454
        %v459 = vpack.c.b16 %v457, %v456
        %v464 = vunpack.c.l.b16 %v410
        %v465 = vunpack.c.h.b16 %v410
        %v466 = vunpack.c.l.b16 %v411
        %v467 = vunpack.c.h.b16 %v411
        %v468 = vunpack.c.l.b16 %v412
        %v469 = vunpack.c.h.b16 %v412
        %v470 = vunpack.c.l.b16 %v413
        %v471 = vunpack.c.h.b16 %v413
        %v472 = vpack.c.b16 %v466, %v464
        %v473 = vpack.c.b16 %v467, %v465
        %v474 = vpack.c.b16 %v470, %v468
        %v475 = vpack.c.b16 %v471, %v469
        %vm480 = vcmask 261120
        %v482 = vsel %vm480, %v458, 0
        %v485 = vsel %vm480, %v459, 0
        %487 = vmatpush.bf16.msra.mxu0 0
        %488 = vmatpush.bf16.msra.mxu0 0
        %489 = vmatpush.bf16.msra.mxu0 0
        %490 = vmatpush.bf16.msra.mxu0 0
        %491 = vmatpush.bf16.msra.mxu0 0
        %492 = vmatpush.bf16.msra.mxu0 0
        %493 = vmatpush.bf16.msra.mxu0 %v474
        %494 = vmatpush.bf16.msra.mxu0 %v472
        %495 = vmatmul.bf16.gmra.mxu0 %v482
        %v496 = vpop.f32.mrf.mxu0
        %v497 = vadd.f32 %v433, %v496
        %v498 = vpop.f32.mrf.mxu0
        %v499 = vadd.f32 %v438, %v498
        %500 = vmatmul.bf16.gmra.mxu0 %v485
        %v501 = vpop.f32.mrf.mxu0
        %v502 = vadd.f32 %v443, %v501
        %v503 = vpop.f32.mrf.mxu0
        %v504 = vadd.f32 %v448, %v503
        %505 = vdwg.mxu0
        %506 = vmatpush.bf16.msra.mxu0 0
        %507 = vmatpush.bf16.msra.mxu0 0
        %508 = vmatpush.bf16.msra.mxu0 0
        %509 = vmatpush.bf16.msra.mxu0 0
        %510 = vmatpush.bf16.msra.mxu0 0
        %511 = vmatpush.bf16.msra.mxu0 0
        %512 = vmatpush.bf16.msra.mxu0 %v475
        %513 = vmatpush.bf16.msra.mxu0 %v473
        %514 = vmatmul.bf16.gmra.mxu0 %v482
        %v515 = vpop.f32.mrf.mxu0
        %v516 = vadd.f32 %v433, %v515
        %v517 = vpop.f32.mrf.mxu0
        %v518 = vadd.f32 %v438, %v517
        %519 = vmatmul.bf16.gmra.mxu0 %v485
        %v520 = vpop.f32.mrf.mxu0
        %v521 = vadd.f32 %v443, %v520
        %v522 = vpop.f32.mrf.mxu0
        %v523 = vadd.f32 %v448, %v522
        %524 = vdwg.mxu0
        %v525 = vmax.f32 %v497, 0.0
        %v526 = vmax.f32 %v516, 0.0
        %v527 = vmax.f32 %v499, 0.0
        %v528 = vmax.f32 %v518, 0.0
        %v529 = vmax.f32 %v502, 0.0
        %v530 = vmax.f32 %v521, 0.0
        %v531 = vmax.f32 %v504, 0.0
        %v532 = vmax.f32 %v523, 0.0
        %v533 = vld [vmem:[%s3] sm:$0xf]
        %v534 = vld [vmem:[%s3 + $0x4] sm:$0xf]
        %v535 = vld [vmem:[%s3 + $0x8] sm:$0xf]
        %v536 = vld [vmem:[%s3 + $0xc] sm:$0xf]
        %v537 = vpack.c.bf16 %v527, %v525
        %v538 = vpack.c.bf16 %v528, %v526
        %v539 = vpack.c.bf16 %v531, %v529
        %v540 = vpack.c.bf16 %v532, %v530
        %v541 = vld [vmem:[%s4] sm:$0xff]
        %v542 = vld [vmem:[%s4 + $0x8] sm:$0xff]
        %v543 = vld [vmem:[%s4 + $0x10] sm:$0xff]
        %v544 = vld [vmem:[%s4 + $0x18] sm:$0xff]
        %546 = vset.pattern.permute.xlu0 0
        %547 = vperm.xlu0 %546, %v541
        %v548 = vpop.permute.xlu0 %547
        %551 = vset.pattern.permute.xlu0 0
        %552 = vperm.xlu0 %551, %v542
        %v553 = vpop.permute.xlu0 %552
        %556 = vset.pattern.permute.xlu0 0
        %557 = vperm.xlu0 %556, %v543
        %v558 = vpop.permute.xlu0 %557
        %561 = vset.pattern.permute.xlu0 0
        %562 = vperm.xlu0 %561, %v544
        %v563 = vpop.permute.xlu0 %562
        %v569 = vunpack.c.l.b16 %v533
        %v570 = vunpack.c.l.b16 %v534
        %v571 = vunpack.c.l.b16 %v535
        %v572 = vunpack.c.l.b16 %v536
        %v573 = vpack.c.b16 %v570, %v569
        %v574 = vpack.c.b16 %v572, %v571
        %v576 = vsel %vm480, %v573, 0
        %v579 = vsel %vm480, %v574, 0
        %581 = vmatpush.bf16.msra.mxu0 0
        %582 = vmatpush.bf16.msra.mxu0 0
        %583 = vmatpush.bf16.msra.mxu0 0
        %584 = vmatpush.bf16.msra.mxu0 0
        %585 = vmatpush.bf16.msra.mxu0 0
        %586 = vmatpush.bf16.msra.mxu0 0
        %587 = vmatpush.bf16.msra.mxu0 %v539
        %588 = vmatpush.bf16.msra.mxu0 %v537
        %589 = vmatmul.bf16.gmra.mxu0 %v576
        %v590 = vpop.f32.mrf.mxu0
        %v591 = vadd.f32 %v548, %v590
        %v592 = vpop.f32.mrf.mxu0
        %v593 = vadd.f32 %v553, %v592
        %594 = vmatmul.bf16.gmra.mxu0 %v579
        %v595 = vpop.f32.mrf.mxu0
        %v596 = vadd.f32 %v558, %v595
        %v597 = vpop.f32.mrf.mxu0
        %v598 = vadd.f32 %v563, %v597
        %599 = vdwg.mxu0
        %600 = vmatpush.bf16.msra.mxu0 0
        %601 = vmatpush.bf16.msra.mxu0 0
        %602 = vmatpush.bf16.msra.mxu0 0
        %603 = vmatpush.bf16.msra.mxu0 0
        %604 = vmatpush.bf16.msra.mxu0 0
        %605 = vmatpush.bf16.msra.mxu0 0
        %606 = vmatpush.bf16.msra.mxu0 %v540
        %607 = vmatpush.bf16.msra.mxu0 %v538
        %608 = vmatmul.bf16.gmra.mxu0 %v576
        %v609 = vpop.f32.mrf.mxu0
        %v610 = vadd.f32 %v548, %v609
        %v611 = vpop.f32.mrf.mxu0
        %v612 = vadd.f32 %v553, %v611
        %613 = vmatmul.bf16.gmra.mxu0 %v579
        %v614 = vpop.f32.mrf.mxu0
        %v615 = vadd.f32 %v558, %v614
        %v616 = vpop.f32.mrf.mxu0
        %v617 = vadd.f32 %v563, %v616
        %618 = vdwg.mxu0
        %v619 = vadd.f32 %v591, %v414
        %v620 = vadd.f32 %v610, %v415
        %v621 = vadd.f32 %v593, %v416
        %v622 = vadd.f32 %v612, %v417
        %v623 = vadd.f32 %v596, %v418
        %v624 = vadd.f32 %v615, %v419
        %v625 = vadd.f32 %v598, %v420
        %v626 = vadd.f32 %v617, %v421
        %v627 = vmax.f32 %v619, 0.0
        %v628 = vmax.f32 %v620, 0.0
        %v629 = vmax.f32 %v621, 0.0
        %v630 = vmax.f32 %v622, 0.0
        %v631 = vmax.f32 %v623, 0.0
        %v632 = vmax.f32 %v624, 0.0
        %v633 = vmax.f32 %v625, 0.0
        %v634 = vmax.f32 %v626, 0.0
        %v635 = vld [vmem:[%s5] sm:$0xf]
        %v636 = vld [vmem:[%s5 + $0x4] sm:$0xf]
        %v637 = vld [vmem:[%s5 + $0x8] sm:$0xf]
        %v638 = vld [vmem:[%s5 + $0xc] sm:$0xf]
        %v639 = vld [vmem:[%s5 + $0x10] sm:$0xf]
        %v640 = vld [vmem:[%s5 + $0x14] sm:$0xf]
        %v641 = vld [vmem:[%s5 + $0x18] sm:$0xf]
        %v642 = vld [vmem:[%s5 + $0x1c] sm:$0xf]
        %v643 = vpack.c.bf16 %v629, %v627
        %v644 = vpack.c.bf16 %v630, %v628
        %v645 = vpack.c.bf16 %v633, %v631
        %v646 = vpack.c.bf16 %v634, %v632
        %v647 = vld [vmem:[%s6] sm:$0xff]
        %v648 = vld [vmem:[%s6 + $0x8] sm:$0xff]
        %v649 = vld [vmem:[%s6 + $0x10] sm:$0xff]
        %v650 = vld [vmem:[%s6 + $0x18] sm:$0xff]
        %v651 = vld [vmem:[%s6 + $0x20] sm:$0xff]
        %v652 = vld [vmem:[%s6 + $0x28] sm:$0xff]
        %v653 = vld [vmem:[%s6 + $0x30] sm:$0xff]
        %v654 = vld [vmem:[%s6 + $0x38] sm:$0xff]
        %656 = vset.pattern.permute.xlu0 0
        %657 = vperm.xlu0 %656, %v647
        %v658 = vpop.permute.xlu0 %657
        %661 = vset.pattern.permute.xlu0 0
        %662 = vperm.xlu0 %661, %v648
        %v663 = vpop.permute.xlu0 %662
        %666 = vset.pattern.permute.xlu0 0
        %667 = vperm.xlu0 %666, %v649
        %v668 = vpop.permute.xlu0 %667
        %671 = vset.pattern.permute.xlu0 0
        %672 = vperm.xlu0 %671, %v650
        %v673 = vpop.permute.xlu0 %672
        %676 = vset.pattern.permute.xlu0 0
        %677 = vperm.xlu0 %676, %v651
        %v678 = vpop.permute.xlu0 %677
        %681 = vset.pattern.permute.xlu0 0
        %682 = vperm.xlu0 %681, %v652
        %v683 = vpop.permute.xlu0 %682
        %686 = vset.pattern.permute.xlu0 0
        %687 = vperm.xlu0 %686, %v653
        %v688 = vpop.permute.xlu0 %687
        %691 = vset.pattern.permute.xlu0 0
        %692 = vperm.xlu0 %691, %v654
        %v693 = vpop.permute.xlu0 %692
        %v703 = vunpack.c.l.b16 %v635
        %v704 = vunpack.c.l.b16 %v636
        %v705 = vunpack.c.l.b16 %v637
        %v706 = vunpack.c.l.b16 %v638
        %v707 = vunpack.c.l.b16 %v639
        %v708 = vunpack.c.l.b16 %v640
        %v709 = vunpack.c.l.b16 %v641
        %v710 = vunpack.c.l.b16 %v642
        %v711 = vpack.c.b16 %v704, %v703
        %v712 = vpack.c.b16 %v706, %v705
        %v713 = vpack.c.b16 %v708, %v707
        %v714 = vpack.c.b16 %v710, %v709
        %v716 = vsel %vm480, %v711, 0
        %v719 = vsel %vm480, %v712, 0
        %v722 = vsel %vm480, %v713, 0
        %v725 = vsel %vm480, %v714, 0
        %727 = vmatpush.bf16.msra.mxu0 0
        %728 = vmatpush.bf16.msra.mxu0 0
        %729 = vmatpush.bf16.msra.mxu0 0
        %730 = vmatpush.bf16.msra.mxu0 0
        %731 = vmatpush.bf16.msra.mxu0 0
        %732 = vmatpush.bf16.msra.mxu0 0
        %733 = vmatpush.bf16.msra.mxu0 %v645
        %734 = vmatpush.bf16.msra.mxu0 %v643
        %735 = vmatmul.bf16.gmra.mxu0 %v716
        %v736 = vpop.f32.mrf.mxu0
        %v737 = vadd.f32 %v658, %v736
        %v738 = vpop.f32.mrf.mxu0
        %v739 = vadd.f32 %v663, %v738
        %740 = vmatmul.bf16.gmra.mxu0 %v719
        %v741 = vpop.f32.mrf.mxu0
        %v742 = vadd.f32 %v668, %v741
        %v743 = vpop.f32.mrf.mxu0
        %v744 = vadd.f32 %v673, %v743
        %745 = vmatmul.bf16.gmra.mxu0 %v722
        %v746 = vpop.f32.mrf.mxu0
        %v747 = vadd.f32 %v678, %v746
        %v748 = vpop.f32.mrf.mxu0
        %v749 = vadd.f32 %v683, %v748
        %750 = vmatmul.bf16.gmra.mxu0 %v725
        %v751 = vpop.f32.mrf.mxu0
        %v752 = vadd.f32 %v688, %v751
        %v753 = vpop.f32.mrf.mxu0
        %v754 = vadd.f32 %v693, %v753
        %755 = vdwg.mxu0
        %756 = vmatpush.bf16.msra.mxu0 0
        %757 = vmatpush.bf16.msra.mxu0 0
        %758 = vmatpush.bf16.msra.mxu0 0
        %759 = vmatpush.bf16.msra.mxu0 0
        %760 = vmatpush.bf16.msra.mxu0 0
        %761 = vmatpush.bf16.msra.mxu0 0
        %762 = vmatpush.bf16.msra.mxu0 %v646
        %763 = vmatpush.bf16.msra.mxu0 %v644
        %764 = vmatmul.bf16.gmra.mxu0 %v716
        %v765 = vpop.f32.mrf.mxu0
        %v766 = vadd.f32 %v658, %v765
        %v767 = vpop.f32.mrf.mxu0
        %v768 = vadd.f32 %v663, %v767
        %769 = vmatmul.bf16.gmra.mxu0 %v719
        %v770 = vpop.f32.mrf.mxu0
        %v771 = vadd.f32 %v668, %v770
        %v772 = vpop.f32.mrf.mxu0
        %v773 = vadd.f32 %v673, %v772
        %774 = vmatmul.bf16.gmra.mxu0 %v722
        %v775 = vpop.f32.mrf.mxu0
        %v776 = vadd.f32 %v678, %v775
        %v777 = vpop.f32.mrf.mxu0
        %v778 = vadd.f32 %v683, %v777
        %779 = vmatmul.bf16.gmra.mxu0 %v725
        %v780 = vpop.f32.mrf.mxu0
        %v781 = vadd.f32 %v688, %v780
        %v782 = vpop.f32.mrf.mxu0
        %v783 = vadd.f32 %v693, %v782
        %784 = vdwg.mxu0
        %v785 = vmax.f32 %v737, 0.0
        %v786 = vmax.f32 %v766, 0.0
        %v787 = vmax.f32 %v739, 0.0
        %v788 = vmax.f32 %v768, 0.0
        %v789 = vmax.f32 %v742, 0.0
        %v790 = vmax.f32 %v771, 0.0
        %v791 = vmax.f32 %v744, 0.0
        %v792 = vmax.f32 %v773, 0.0
        %v793 = vmax.f32 %v747, 0.0
        %v794 = vmax.f32 %v776, 0.0
        %v795 = vmax.f32 %v749, 0.0
        %v796 = vmax.f32 %v778, 0.0
        %v797 = vmax.f32 %v752, 0.0
        %v798 = vmax.f32 %v781, 0.0
        %v799 = vmax.f32 %v754, 0.0
        %v800 = vmax.f32 %v783, 0.0
        %v801 = vld [vmem:[%s7] sm:$0x3]
        %v802 = vpack.c.bf16 %v787, %v785
        %v803 = vpack.c.bf16 %v788, %v786
        %v804 = vpack.c.bf16 %v791, %v789
        %v805 = vpack.c.bf16 %v792, %v790
        %v806 = vpack.c.bf16 %v795, %v793
        %v807 = vpack.c.bf16 %v796, %v794
        %v808 = vpack.c.bf16 %v799, %v797
        %v809 = vpack.c.bf16 %v800, %v798
        %v810 = vld [vmem:[%s8] sm:$0x7]
        %812 = vset.pattern.permute.xlu0 0
        %813 = vperm.xlu0 %812, %v810
        %v814 = vpop.permute.xlu0 %813
        %vm816 = vcmask 523264
        %v818 = vsel %vm816, %v801, 0
        %820 = vmatpush.bf16.msra.mxu0 0
        %821 = vmatpush.bf16.msra.mxu0 0
        %822 = vmatpush.bf16.msra.mxu0 0
        %823 = vmatpush.bf16.msra.mxu0 0
        %824 = vmatpush.bf16.msra.mxu0 %v808
        %825 = vmatpush.bf16.msra.mxu0 %v806
        %826 = vmatpush.bf16.msra.mxu0 %v804
        %827 = vmatpush.bf16.msra.mxu0 %v802
        %828 = vmatmul.bf16.gmra.mxu0 %v818
        %v829 = vpop.f32.mrf.mxu0
        %v830 = vadd.f32 %v814, %v829
        %v831 = vpop.f32.mrf.mxu0
        %832 = vdwg.mxu0
        %833 = vmatpush.bf16.msra.mxu0 0
        %834 = vmatpush.bf16.msra.mxu0 0
        %835 = vmatpush.bf16.msra.mxu0 0
        %836 = vmatpush.bf16.msra.mxu0 0
        %837 = vmatpush.bf16.msra.mxu0 %v809
        %838 = vmatpush.bf16.msra.mxu0 %v807
        %839 = vmatpush.bf16.msra.mxu0 %v805
        %840 = vmatpush.bf16.msra.mxu0 %v803
        %841 = vmatmul.bf16.gmra.mxu0 %v818
        %v842 = vpop.f32.mrf.mxu0
        %v843 = vadd.f32 %v814, %v842
        %v844 = vpop.f32.mrf.mxu0
        %845 = vdwg.mxu0
        %v848 = vrot.slane %v843, 4
        %vm849 = vcmask 1043456
        %v850 = vsel %vm849, %v830, %v848
        %852 = vst [vmem:[%s407] sm:$0x77] %v850
        %s853 = smul.u32 2, %s25
        %p854 = scmp.lt.s32.totalorder %s24, 1
        %s855 = scalar_select %p854, %s24, 1
        %p856 = scmp.lt.s32.totalorder %s853, 3
        %s857 = scalar_select %p856, %s853, 3
        %s858 = smul.addr %s855, 4
        %s859 = sadd.s32 %s857, %s858
        %s860 = smul.addr %s859, 4
        %s861 = scalar_lea.vmem %s9, %s860
        // Predicated region
        $region95: #{_lambda_.7} parent=89 // pred_check
          %p862 = pneg %p248
        $region96: #{_lambda_.7} parent=89 // pred_check_branch
          %864 = sbr.rel (%p862) target = $region98
        $region97: #{_lambda_.7} parent=89 // pred_region
          %s865 = smul.u32 2, %s25
        $region98: #{_lambda_.7} parent=89 // pred_fallthru
          _
      $region90: #{_lambda_.7} parent=5 // pred_fallthru
        _
      %p866 = scmp.le.s32.totalorder 2, %s15
      // Predicated region
      $region99: #{_lambda_.7} parent=5 // pred_check
        %p867 = pneg %p866
      $region100: #{_lambda_.7} parent=5 // pred_check_branch
        %869 = sbr.rel (%p867) target = $region102
      $region101: #{_lambda_.7} parent=5 // pred_region
        %s870 = ssub.s32 %s15, 2
        // Predicated region
        $region103: #{_lambda_.7} parent=101 // pred_check
          %p871 = pneg %p254
        $region104: #{_lambda_.7} parent=101 // pred_check_branch
          %873 = sbr.rel (%p871) target = $region106
        $region105: #{_lambda_.7} parent=101 // pred_region
          %s874 = smul.u32 2, %s27
          %p875 = scmp.lt.s32.totalorder %s26, 1
          %s876 = scalar_select %p875, %s26, 1
          %p877 = scmp.lt.s32.totalorder %s874, 3
          %s878 = scalar_select %p877, %s874, 3
          %s879 = smul.addr %s876, 4
          %s880 = sadd.s32 %s878, %s879
          %s881 = smul.addr %s880, 4
          %s882 = scalar_lea.vmem %s9, %s881
        $region106: #{_lambda_.7} parent=101 // pred_fallthru
          _
      $region102: #{_lambda_.7} parent=5 // pred_fallthru
        _
    $region6: #{_lambda_.7} parent=1 // loop_footer
      %s19 = sadd.s32 1, %s15
    $region7: #{_lambda_.7} parent=1 // loop_footer_branch
      %14 = sbr.rel target = $region3
    $region8: #{_lambda_.7} parent=1 // loop_exit
      _

</llo_original>
